<compile_context>
chip_gen: v6e
topology: v6e:2x2x1
jax: 0.10.0
libtpu: 0.0.40
codegen_flags: <defaults>
</compile_context>

<pallas_src>
import functools

import jax
import jax.numpy as jnp
from jax.experimental import pallas as pl
from jax.experimental.pallas import tpu as pltpu


# ------------------------------ fused kernel ----------------------------------
def fused_forecaster_kernel(x_ref, wih_ref, whh_ref, b_ref,
                            w1_ref, gamma_ref, beta_ref,
                            w2_ref, b2_ref, o_ref, *,
                            seq_len, batch, hidden_dim):
    T, B, H = seq_len, batch, hidden_dim
    N = T * B

    # ---- LSTM: hoisted input projection (one matmul over all T*B rows) ------
    # Gate column order here is (i, f, o, g) -- reordered in the wrapper.
    gates_x = (jnp.dot(x_ref[...], wih_ref[...],
                       preferred_element_type=jnp.float32)
               + b_ref[...])                                    # (N, 4H)
    whh = whh_ref[...]                                          # (H, 4H), live across the loop

    h = jnp.zeros((B, H), jnp.float32)
    c = jnp.zeros((B, H), jnp.float32)
    hs = []

    # Fully unrolled serial recurrence (T small & static). Only h @ W_hh plus
    # a 3H-wide sigmoid / H-wide tanh are on the critical path each step.
    for t in range(T):
        gates = gates_x[t * B:(t + 1) * B, :] + jnp.dot(
            h, whh, preferred_element_type=jnp.float32)         # (B, 4H)
        sg = jax.nn.sigmoid(gates[:, :3 * H])                   # i | f | o
        g = jnp.tanh(gates[:, 3 * H:])                          # g
        i = sg[:, 0 * H:1 * H]
        f = sg[:, 1 * H:2 * H]
        o = sg[:, 2 * H:3 * H]
        c = f * c + i * g
        h = o * jnp.tanh(c)
        hs.append(h)                                            # stays in vregs

    hseq = jnp.concatenate(hs, axis=0)                          # (N, H)

    # ---- FC1 -> BatchNorm1d (training batch stats, affine folded) -> ReLU ---
    # fc1 bias omitted: a constant bias cancels exactly under batch-stat BN.
    y = jnp.dot(hseq, w1_ref[...],
                preferred_element_type=jnp.float32)             # (N, H2)
    mean = jnp.mean(y, axis=0, keepdims=True)
    var = jnp.mean((y - mean) ** 2, axis=0, keepdims=True)      # biased var
    scale = gamma_ref[...] * jax.lax.rsqrt(var + 1e-5)
    shift = beta_ref[...] - mean * scale
    y = jnp.maximum(y * scale + shift, 0.0)                     # ReLU

    # ---- estimator: lane-dense (1, N) row via a single A @ B^T MXU push -----
    b2 = b2_ref[0, 0]                                           # scalar from SMEM
    out_row = jax.lax.dot_general(
        w2_ref[...], y,
        dimension_numbers=(((1,), (1,)), ((), ())),
        preferred_element_type=jnp.float32)                     # (1, N)
    o_ref[...] = out_row + b2


# ------------------------------ wrapper ----------------------------------------
def _reorder_gates(w):
    """PyTorch gate order i|f|g|o -> kernel order i|f|o|g along the last axis."""
    H = w.shape[-1] // 4
    return jnp.concatenate(
        [w[..., :2 * H], w[..., 3 * H:], w[..., 2 * H:3 * H]], axis=-1)


def _to_kernel_params(params):
    return {
        "w_ih_t": _reorder_gates(params["w_ih_t"]),
        "w_hh_t": _reorder_gates(params["w_hh_t"]),
        "b_lstm": _reorder_gates(params["b_lstm"]),
        "w1_t": params["w1_t"],
        # b1 intentionally dropped (cancels under batch-stat BatchNorm).
        "gamma": params["gamma"],
        "beta": params["beta"],
        "w2_t": params["w2_t"],
        "b2": params["b2"],
    }


def forecaster_forward(x, params):
    """x: (T, B, D). Returns (T*B, 1), matching the PyTorch module."""
    T, B, D = x.shape
    H = params["w_hh_t"].shape[0]
    H2 = params["w1_t"].shape[1]
    N = T * B
    x_flat = x.reshape(N, D)
    kp = _to_kernel_params(params)

    kernel = functools.partial(fused_forecaster_kernel,
                               seq_len=T, batch=B, hidden_dim=H)

    def full(shape):
        return pl.BlockSpec(shape, lambda: (0,) * len(shape))

    out_row = pl.pallas_call(
        kernel,
        out_shape=jax.ShapeDtypeStruct((1, N), jnp.float32),   # lane-dense row
        in_specs=[
            full((N, D)),            # x (flattened, seq-major)
            full((D, 4 * H)),        # W_ih^T  (i|f|o|g)
            full((H, 4 * H)),        # W_hh^T  (i|f|o|g)
            full((1, 4 * H)),        # b_ih + b_hh (i|f|o|g)
            full((H, H2)),           # fc1 weight^T
            full((1, H2)),           # bn gamma
            full((1, H2)),           # bn beta
            full((1, H2)),           # estimator weight (row)
            pl.BlockSpec(memory_space=pltpu.MemorySpace.SMEM),  # estimator bias (1,1)
        ],
        out_specs=full((1, N)),
    )(x_flat, kp["w_ih_t"], kp["w_hh_t"], kp["b_lstm"],
      kp["w1_t"], kp["gamma"], kp["beta"], kp["w2_t"], kp["b2"])

    return out_row.reshape(N, 1)


# ------------------------- pure-JAX reference (for check) ---------------------
def reference_forward(x, params):
    H = params["w_hh_t"].shape[0]

    def step(carry, xt):
        h, c = carry
        gates = xt @ params["w_ih_t"] + h @ params["w_hh_t"] + params["b_lstm"]
        i = jax.nn.sigmoid(gates[:, 0 * H:1 * H])
        f = jax.nn.sigmoid(gates[:, 1 * H:2 * H])
        g = jnp.tanh(gates[:, 2 * H:3 * H])
        o = jax.nn.sigmoid(gates[:, 3 * H:4 * H])
        c = f * c + i * g
        h = o * jnp.tanh(c)
        return (h, c), h

    B = x.shape[1]
    h0 = jnp.zeros((B, H), jnp.float32)
    _, outs = jax.lax.scan(step, (h0, h0), x)
    y = outs.reshape(-1, H) @ params["w1_t"] + params["b1"]
    mean = jnp.mean(y, axis=0, keepdims=True)
    var = jnp.mean((y - mean) ** 2, axis=0, keepdims=True)
    y = params["gamma"] * ((y - mean) / jnp.sqrt(var + 1e-5)) + params["beta"]
    y = jnp.maximum(y, 0.0)
    return y @ params["w2_t"].T + params["b2"]


def init_params(key, input_dim, hidden_dim):
    H2 = hidden_dim // 2
    ks = jax.random.split(key, 8)
    k_lstm = 1.0 / jnp.sqrt(hidden_dim)
    k_fc1 = 1.0 / jnp.sqrt(hidden_dim)
    k_fc2 = 1.0 / jnp.sqrt(H2)
    u = lambda k, shape, s: jax.random.uniform(k, shape, jnp.float32, -s, s)
    # LSTM weights stored pre-transposed in PyTorch gate order (i|f|g|o):
    # x @ (D,4H), h @ (H,4H); biases combined.
    return {
        "w_ih_t": u(ks[0], (input_dim, 4 * hidden_dim), k_lstm),
        "w_hh_t": u(ks[1], (hidden_dim, 4 * hidden_dim), k_lstm),
        "b_lstm": u(ks[2], (1, 4 * hidden_dim), k_lstm) + u(ks[3], (1, 4 * hidden_dim), k_lstm),
        "w1_t": u(ks[4], (hidden_dim, H2), k_fc1),
        "b1": u(ks[5], (1, H2), k_fc1),
        "gamma": jnp.ones((1, H2), jnp.float32),   # BatchNorm1d default init
        "beta": jnp.zeros((1, H2), jnp.float32),
        "w2_t": u(ks[6], (1, H2), k_fc2),          # estimator weight as a row
        "b2": u(ks[7], (1, 1), k_fc2),
    }


if __name__ == "__main__":
    # seq len, batch (>=8 to fill the sublane dim), input_dim (time lags), hidden_dim
    T, B, D, H = 8, 8, 4, 32
    key = jax.random.PRNGKey(0)
    kx, kp = jax.random.split(key)
    x = jax.random.normal(kx, (T, B, D), jnp.float32)
    params = init_params(kp, D, H)

    out = forecaster_forward(x, params)
    out = jax.block_until_ready(out)

    ref = reference_forward(x, params)
    assert out.shape == (T * B, 1), out.shape
    assert jnp.allclose(out, ref, atol=1e-4, rtol=1e-4), float(jnp.max(jnp.abs(out - ref)))
    print("KERNEL_OK")
</pallas_src>

<mosaic_0001>
module attributes {stable_mosaic.version = 11 : i64} {
  func.func @fused_forecaster_kernel(%arg0: memref<64x4xf32, #tpu.memory_space<vmem>>, %arg1: memref<4x128xf32, #tpu.memory_space<vmem>>, %arg2: memref<32x128xf32, #tpu.memory_space<vmem>>, %arg3: memref<1x128xf32, #tpu.memory_space<vmem>>, %arg4: memref<32x16xf32, #tpu.memory_space<vmem>>, %arg5: memref<1x16xf32, #tpu.memory_space<vmem>>, %arg6: memref<1x16xf32, #tpu.memory_space<vmem>>, %arg7: memref<1x16xf32, #tpu.memory_space<vmem>>, %arg8: memref<1x1xf32, #tpu.memory_space<smem>>, %arg9: memref<1x64xf32, #tpu.memory_space<vmem>>) attributes {dimension_semantics = [], scalar_prefetch = 0 : i64, scratch_operands = 0 : i64, tpu.core_type = #tpu.core_type<tc>} {
    %c0 = arith.constant 0 : index
    %c0_0 = arith.constant 0 : index
    %0 = vector.load %arg0[%c0, %c0_0] : memref<64x4xf32, #tpu.memory_space<vmem>>, vector<64x4xf32>
    %c0_1 = arith.constant 0 : index
    %c0_2 = arith.constant 0 : index
    %1 = vector.load %arg1[%c0_1, %c0_2] : memref<4x128xf32, #tpu.memory_space<vmem>>, vector<4x128xf32>
    %cst = arith.constant dense<0.000000e+00> : vector<64x128xf32>
    %2 = tpu.matmul %0, %1, %cst {dimension_numbers = #tpu.dot_dimension_numbers<[1], [0], [0], [1], [0, 0, 1, 1], [], []>} : vector<64x4xf32>, vector<4x128xf32>, vector<64x128xf32> -> vector<64x128xf32>
    %c0_3 = arith.constant 0 : index
    %c0_4 = arith.constant 0 : index
    %3 = vector.load %arg3[%c0_3, %c0_4] : memref<1x128xf32, #tpu.memory_space<vmem>>, vector<1x128xf32>
    %4 = vector.broadcast %3 : vector<1x128xf32> to vector<64x128xf32>
    %5 = arith.addf %2, %4 : vector<64x128xf32>
    %c0_5 = arith.constant 0 : index
    %c0_6 = arith.constant 0 : index
    %6 = vector.load %arg2[%c0_5, %c0_6] : memref<32x128xf32, #tpu.memory_space<vmem>>, vector<32x128xf32>
    %cst_7 = arith.constant 0.000000e+00 : f32
    %7 = vector.broadcast %cst_7 : f32 to vector<8x32xf32>
    %cst_8 = arith.constant 0.000000e+00 : f32
    %8 = vector.broadcast %cst_8 : f32 to vector<8x32xf32>
    %9 = vector.extract_strided_slice %5 {offsets = [0, 0], sizes = [8, 128], strides = [1, 1]} : vector<64x128xf32> to vector<8x128xf32>
    %cst_9 = arith.constant dense<0.000000e+00> : vector<8x128xf32>
    %10 = tpu.matmul %7, %6, %cst_9 {dimension_numbers = #tpu.dot_dimension_numbers<[1], [0], [0], [1], [0, 0, 1, 1], [], []>} : vector<8x32xf32>, vector<32x128xf32>, vector<8x128xf32> -> vector<8x128xf32>
    %11 = arith.addf %9, %10 : vector<8x128xf32>
    %12 = vector.extract_strided_slice %11 {offsets = [0, 0], sizes = [8, 96], strides = [1, 1]} : vector<8x128xf32> to vector<8x96xf32>
    %13 = arith.negf %12 : vector<8x96xf32>
    %14 = math.exp %13 : vector<8x96xf32>
    %cst_10 = arith.constant 1.000000e+00 : f32
    %15 = vector.broadcast %cst_10 : f32 to vector<8x96xf32>
    %16 = arith.addf %15, %14 : vector<8x96xf32>
    %17 = arith.divf %15, %16 : vector<8x96xf32>
    %18 = vector.extract_strided_slice %11 {offsets = [0, 96], sizes = [8, 32], strides = [1, 1]} : vector<8x128xf32> to vector<8x32xf32>
    %19 = math.tanh %18 : vector<8x32xf32>
    %20 = vector.extract_strided_slice %17 {offsets = [0, 0], sizes = [8, 32], strides = [1, 1]} : vector<8x96xf32> to vector<8x32xf32>
    %21 = vector.extract_strided_slice %17 {offsets = [0, 32], sizes = [8, 32], strides = [1, 1]} : vector<8x96xf32> to vector<8x32xf32>
    %22 = vector.extract_strided_slice %17 {offsets = [0, 64], sizes = [8, 32], strides = [1, 1]} : vector<8x96xf32> to vector<8x32xf32>
    %23 = arith.mulf %21, %8 : vector<8x32xf32>
    %24 = arith.mulf %20, %19 : vector<8x32xf32>
    %25 = arith.addf %23, %24 : vector<8x32xf32>
    %26 = math.tanh %25 : vector<8x32xf32>
    %27 = arith.mulf %22, %26 : vector<8x32xf32>
    %28 = vector.extract_strided_slice %5 {offsets = [8, 0], sizes = [8, 128], strides = [1, 1]} : vector<64x128xf32> to vector<8x128xf32>
    %cst_11 = arith.constant dense<0.000000e+00> : vector<8x128xf32>
    %29 = tpu.matmul %27, %6, %cst_11 {dimension_numbers = #tpu.dot_dimension_numbers<[1], [0], [0], [1], [0, 0, 1, 1], [], []>} : vector<8x32xf32>, vector<32x128xf32>, vector<8x128xf32> -> vector<8x128xf32>
    %30 = arith.addf %28, %29 : vector<8x128xf32>
    %31 = vector.extract_strided_slice %30 {offsets = [0, 0], sizes = [8, 96], strides = [1, 1]} : vector<8x128xf32> to vector<8x96xf32>
    %32 = arith.negf %31 : vector<8x96xf32>
    %33 = math.exp %32 : vector<8x96xf32>
    %cst_12 = arith.constant 1.000000e+00 : f32
    %34 = vector.broadcast %cst_12 : f32 to vector<8x96xf32>
    %35 = arith.addf %34, %33 : vector<8x96xf32>
    %36 = arith.divf %34, %35 : vector<8x96xf32>
    %37 = vector.extract_strided_slice %30 {offsets = [0, 96], sizes = [8, 32], strides = [1, 1]} : vector<8x128xf32> to vector<8x32xf32>
    %38 = math.tanh %37 : vector<8x32xf32>
    %39 = vector.extract_strided_slice %36 {offsets = [0, 0], sizes = [8, 32], strides = [1, 1]} : vector<8x96xf32> to vector<8x32xf32>
    %40 = vector.extract_strided_slice %36 {offsets = [0, 32], sizes = [8, 32], strides = [1, 1]} : vector<8x96xf32> to vector<8x32xf32>
    %41 = vector.extract_strided_slice %36 {offsets = [0, 64], sizes = [8, 32], strides = [1, 1]} : vector<8x96xf32> to vector<8x32xf32>
    %42 = arith.mulf %40, %25 : vector<8x32xf32>
    %43 = arith.mulf %39, %38 : vector<8x32xf32>
    %44 = arith.addf %42, %43 : vector<8x32xf32>
    %45 = math.tanh %44 : vector<8x32xf32>
    %46 = arith.mulf %41, %45 : vector<8x32xf32>
    %47 = vector.extract_strided_slice %5 {offsets = [16, 0], sizes = [8, 128], strides = [1, 1]} : vector<64x128xf32> to vector<8x128xf32>
    %cst_13 = arith.constant dense<0.000000e+00> : vector<8x128xf32>
    %48 = tpu.matmul %46, %6, %cst_13 {dimension_numbers = #tpu.dot_dimension_numbers<[1], [0], [0], [1], [0, 0, 1, 1], [], []>} : vector<8x32xf32>, vector<32x128xf32>, vector<8x128xf32> -> vector<8x128xf32>
    %49 = arith.addf %47, %48 : vector<8x128xf32>
    %50 = vector.extract_strided_slice %49 {offsets = [0, 0], sizes = [8, 96], strides = [1, 1]} : vector<8x128xf32> to vector<8x96xf32>
    %51 = arith.negf %50 : vector<8x96xf32>
    %52 = math.exp %51 : vector<8x96xf32>
    %cst_14 = arith.constant 1.000000e+00 : f32
    %53 = vector.broadcast %cst_14 : f32 to vector<8x96xf32>
    %54 = arith.addf %53, %52 : vector<8x96xf32>
    %55 = arith.divf %53, %54 : vector<8x96xf32>
    %56 = vector.extract_strided_slice %49 {offsets = [0, 96], sizes = [8, 32], strides = [1, 1]} : vector<8x128xf32> to vector<8x32xf32>
    %57 = math.tanh %56 : vector<8x32xf32>
    %58 = vector.extract_strided_slice %55 {offsets = [0, 0], sizes = [8, 32], strides = [1, 1]} : vector<8x96xf32> to vector<8x32xf32>
    %59 = vector.extract_strided_slice %55 {offsets = [0, 32], sizes = [8, 32], strides = [1, 1]} : vector<8x96xf32> to vector<8x32xf32>
    %60 = vector.extract_strided_slice %55 {offsets = [0, 64], sizes = [8, 32], strides = [1, 1]} : vector<8x96xf32> to vector<8x32xf32>
    %61 = arith.mulf %59, %44 : vector<8x32xf32>
    %62 = arith.mulf %58, %57 : vector<8x32xf32>
    %63 = arith.addf %61, %62 : vector<8x32xf32>
    %64 = math.tanh %63 : vector<8x32xf32>
    %65 = arith.mulf %60, %64 : vector<8x32xf32>
    %66 = vector.extract_strided_slice %5 {offsets = [24, 0], sizes = [8, 128], strides = [1, 1]} : vector<64x128xf32> to vector<8x128xf32>
    %cst_15 = arith.constant dense<0.000000e+00> : vector<8x128xf32>
    %67 = tpu.matmul %65, %6, %cst_15 {dimension_numbers = #tpu.dot_dimension_numbers<[1], [0], [0], [1], [0, 0, 1, 1], [], []>} : vector<8x32xf32>, vector<32x128xf32>, vector<8x128xf32> -> vector<8x128xf32>
    %68 = arith.addf %66, %67 : vector<8x128xf32>
    %69 = vector.extract_strided_slice %68 {offsets = [0, 0], sizes = [8, 96], strides = [1, 1]} : vector<8x128xf32> to vector<8x96xf32>
    %70 = arith.negf %69 : vector<8x96xf32>
    %71 = math.exp %70 : vector<8x96xf32>
    %cst_16 = arith.constant 1.000000e+00 : f32
    %72 = vector.broadcast %cst_16 : f32 to vector<8x96xf32>
    %73 = arith.addf %72, %71 : vector<8x96xf32>
    %74 = arith.divf %72, %73 : vector<8x96xf32>
    %75 = vector.extract_strided_slice %68 {offsets = [0, 96], sizes = [8, 32], strides = [1, 1]} : vector<8x128xf32> to vector<8x32xf32>
    %76 = math.tanh %75 : vector<8x32xf32>
    %77 = vector.extract_strided_slice %74 {offsets = [0, 0], sizes = [8, 32], strides = [1, 1]} : vector<8x96xf32> to vector<8x32xf32>
    %78 = vector.extract_strided_slice %74 {offsets = [0, 32], sizes = [8, 32], strides = [1, 1]} : vector<8x96xf32> to vector<8x32xf32>
    %79 = vector.extract_strided_slice %74 {offsets = [0, 64], sizes = [8, 32], strides = [1, 1]} : vector<8x96xf32> to vector<8x32xf32>
    %80 = arith.mulf %78, %63 : vector<8x32xf32>
    %81 = arith.mulf %77, %76 : vector<8x32xf32>
    %82 = arith.addf %80, %81 : vector<8x32xf32>
    %83 = math.tanh %82 : vector<8x32xf32>
    %84 = arith.mulf %79, %83 : vector<8x32xf32>
    %85 = vector.extract_strided_slice %5 {offsets = [32, 0], sizes = [8, 128], strides = [1, 1]} : vector<64x128xf32> to vector<8x128xf32>
    %cst_17 = arith.constant dense<0.000000e+00> : vector<8x128xf32>
    %86 = tpu.matmul %84, %6, %cst_17 {dimension_numbers = #tpu.dot_dimension_numbers<[1], [0], [0], [1], [0, 0, 1, 1], [], []>} : vector<8x32xf32>, vector<32x128xf32>, vector<8x128xf32> -> vector<8x128xf32>
    %87 = arith.addf %85, %86 : vector<8x128xf32>
    %88 = vector.extract_strided_slice %87 {offsets = [0, 0], sizes = [8, 96], strides = [1, 1]} : vector<8x128xf32> to vector<8x96xf32>
    %89 = arith.negf %88 : vector<8x96xf32>
    %90 = math.exp %89 : vector<8x96xf32>
    %cst_18 = arith.constant 1.000000e+00 : f32
    %91 = vector.broadcast %cst_18 : f32 to vector<8x96xf32>
    %92 = arith.addf %91, %90 : vector<8x96xf32>
    %93 = arith.divf %91, %92 : vector<8x96xf32>
    %94 = vector.extract_strided_slice %87 {offsets = [0, 96], sizes = [8, 32], strides = [1, 1]} : vector<8x128xf32> to vector<8x32xf32>
    %95 = math.tanh %94 : vector<8x32xf32>
    %96 = vector.extract_strided_slice %93 {offsets = [0, 0], sizes = [8, 32], strides = [1, 1]} : vector<8x96xf32> to vector<8x32xf32>
    %97 = vector.extract_strided_slice %93 {offsets = [0, 32], sizes = [8, 32], strides = [1, 1]} : vector<8x96xf32> to vector<8x32xf32>
    %98 = vector.extract_strided_slice %93 {offsets = [0, 64], sizes = [8, 32], strides = [1, 1]} : vector<8x96xf32> to vector<8x32xf32>
    %99 = arith.mulf %97, %82 : vector<8x32xf32>
    %100 = arith.mulf %96, %95 : vector<8x32xf32>
    %101 = arith.addf %99, %100 : vector<8x32xf32>
    %102 = math.tanh %101 : vector<8x32xf32>
    %103 = arith.mulf %98, %102 : vector<8x32xf32>
    %104 = vector.extract_strided_slice %5 {offsets = [40, 0], sizes = [8, 128], strides = [1, 1]} : vector<64x128xf32> to vector<8x128xf32>
    %cst_19 = arith.constant dense<0.000000e+00> : vector<8x128xf32>
    %105 = tpu.matmul %103, %6, %cst_19 {dimension_numbers = #tpu.dot_dimension_numbers<[1], [0], [0], [1], [0, 0, 1, 1], [], []>} : vector<8x32xf32>, vector<32x128xf32>, vector<8x128xf32> -> vector<8x128xf32>
    %106 = arith.addf %104, %105 : vector<8x128xf32>
    %107 = vector.extract_strided_slice %106 {offsets = [0, 0], sizes = [8, 96], strides = [1, 1]} : vector<8x128xf32> to vector<8x96xf32>
    %108 = arith.negf %107 : vector<8x96xf32>
    %109 = math.exp %108 : vector<8x96xf32>
    %cst_20 = arith.constant 1.000000e+00 : f32
    %110 = vector.broadcast %cst_20 : f32 to vector<8x96xf32>
    %111 = arith.addf %110, %109 : vector<8x96xf32>
    %112 = arith.divf %110, %111 : vector<8x96xf32>
    %113 = vector.extract_strided_slice %106 {offsets = [0, 96], sizes = [8, 32], strides = [1, 1]} : vector<8x128xf32> to vector<8x32xf32>
    %114 = math.tanh %113 : vector<8x32xf32>
    %115 = vector.extract_strided_slice %112 {offsets = [0, 0], sizes = [8, 32], strides = [1, 1]} : vector<8x96xf32> to vector<8x32xf32>
    %116 = vector.extract_strided_slice %112 {offsets = [0, 32], sizes = [8, 32], strides = [1, 1]} : vector<8x96xf32> to vector<8x32xf32>
    %117 = vector.extract_strided_slice %112 {offsets = [0, 64], sizes = [8, 32], strides = [1, 1]} : vector<8x96xf32> to vector<8x32xf32>
    %118 = arith.mulf %116, %101 : vector<8x32xf32>
    %119 = arith.mulf %115, %114 : vector<8x32xf32>
    %120 = arith.addf %118, %119 : vector<8x32xf32>
    %121 = math.tanh %120 : vector<8x32xf32>
    %122 = arith.mulf %117, %121 : vector<8x32xf32>
    %123 = vector.extract_strided_slice %5 {offsets = [48, 0], sizes = [8, 128], strides = [1, 1]} : vector<64x128xf32> to vector<8x128xf32>
    %cst_21 = arith.constant dense<0.000000e+00> : vector<8x128xf32>
    %124 = tpu.matmul %122, %6, %cst_21 {dimension_numbers = #tpu.dot_dimension_numbers<[1], [0], [0], [1], [0, 0, 1, 1], [], []>} : vector<8x32xf32>, vector<32x128xf32>, vector<8x128xf32> -> vector<8x128xf32>
    %125 = arith.addf %123, %124 : vector<8x128xf32>
    %126 = vector.extract_strided_slice %125 {offsets = [0, 0], sizes = [8, 96], strides = [1, 1]} : vector<8x128xf32> to vector<8x96xf32>
    %127 = arith.negf %126 : vector<8x96xf32>
    %128 = math.exp %127 : vector<8x96xf32>
    %cst_22 = arith.constant 1.000000e+00 : f32
    %129 = vector.broadcast %cst_22 : f32 to vector<8x96xf32>
    %130 = arith.addf %129, %128 : vector<8x96xf32>
    %131 = arith.divf %129, %130 : vector<8x96xf32>
    %132 = vector.extract_strided_slice %125 {offsets = [0, 96], sizes = [8, 32], strides = [1, 1]} : vector<8x128xf32> to vector<8x32xf32>
    %133 = math.tanh %132 : vector<8x32xf32>
    %134 = vector.extract_strided_slice %131 {offsets = [0, 0], sizes = [8, 32], strides = [1, 1]} : vector<8x96xf32> to vector<8x32xf32>
    %135 = vector.extract_strided_slice %131 {offsets = [0, 32], sizes = [8, 32], strides = [1, 1]} : vector<8x96xf32> to vector<8x32xf32>
    %136 = vector.extract_strided_slice %131 {offsets = [0, 64], sizes = [8, 32], strides = [1, 1]} : vector<8x96xf32> to vector<8x32xf32>
    %137 = arith.mulf %135, %120 : vector<8x32xf32>
    %138 = arith.mulf %134, %133 : vector<8x32xf32>
    %139 = arith.addf %137, %138 : vector<8x32xf32>
    %140 = math.tanh %139 : vector<8x32xf32>
    %141 = arith.mulf %136, %140 : vector<8x32xf32>
    %142 = vector.extract_strided_slice %5 {offsets = [56, 0], sizes = [8, 128], strides = [1, 1]} : vector<64x128xf32> to vector<8x128xf32>
    %cst_23 = arith.constant dense<0.000000e+00> : vector<8x128xf32>
    %143 = tpu.matmul %141, %6, %cst_23 {dimension_numbers = #tpu.dot_dimension_numbers<[1], [0], [0], [1], [0, 0, 1, 1], [], []>} : vector<8x32xf32>, vector<32x128xf32>, vector<8x128xf32> -> vector<8x128xf32>
    %144 = arith.addf %142, %143 : vector<8x128xf32>
    %145 = vector.extract_strided_slice %144 {offsets = [0, 0], sizes = [8, 96], strides = [1, 1]} : vector<8x128xf32> to vector<8x96xf32>
    %146 = arith.negf %145 : vector<8x96xf32>
    %147 = math.exp %146 : vector<8x96xf32>
    %cst_24 = arith.constant 1.000000e+00 : f32
    %148 = vector.broadcast %cst_24 : f32 to vector<8x96xf32>
    %149 = arith.addf %148, %147 : vector<8x96xf32>
    %150 = arith.divf %148, %149 : vector<8x96xf32>
    %151 = vector.extract_strided_slice %144 {offsets = [0, 96], sizes = [8, 32], strides = [1, 1]} : vector<8x128xf32> to vector<8x32xf32>
    %152 = math.tanh %151 : vector<8x32xf32>
    %153 = vector.extract_strided_slice %150 {offsets = [0, 0], sizes = [8, 32], strides = [1, 1]} : vector<8x96xf32> to vector<8x32xf32>
    %154 = vector.extract_strided_slice %150 {offsets = [0, 32], sizes = [8, 32], strides = [1, 1]} : vector<8x96xf32> to vector<8x32xf32>
    %155 = vector.extract_strided_slice %150 {offsets = [0, 64], sizes = [8, 32], strides = [1, 1]} : vector<8x96xf32> to vector<8x32xf32>
    %156 = arith.mulf %154, %139 : vector<8x32xf32>
    %157 = arith.mulf %153, %152 : vector<8x32xf32>
    %158 = arith.addf %156, %157 : vector<8x32xf32>
    %159 = math.tanh %158 : vector<8x32xf32>
    %160 = arith.mulf %155, %159 : vector<8x32xf32>
    %161 = tpu.concatenate %27, %46, %65, %84, %103, %122, %141, %160 in 0 : vector<8x32xf32>, vector<8x32xf32>, vector<8x32xf32>, vector<8x32xf32>, vector<8x32xf32>, vector<8x32xf32>, vector<8x32xf32>, vector<8x32xf32> -> vector<64x32xf32>
    %c0_25 = arith.constant 0 : index
    %c0_26 = arith.constant 0 : index
    %162 = vector.load %arg4[%c0_25, %c0_26] : memref<32x16xf32, #tpu.memory_space<vmem>>, vector<32x16xf32>
    %cst_27 = arith.constant dense<0.000000e+00> : vector<64x16xf32>
    %163 = tpu.matmul %161, %162, %cst_27 {dimension_numbers = #tpu.dot_dimension_numbers<[1], [0], [0], [1], [0, 0, 1, 1], [], []>} : vector<64x32xf32>, vector<32x16xf32>, vector<64x16xf32> -> vector<64x16xf32>
    %cst_28 = arith.constant dense<0.000000e+00> : vector<16xf32>
    %164 = vector.multi_reduction <add>, %163, %cst_28 [0] : vector<64x16xf32> to vector<16xf32>
    %165 = vector.shape_cast %164 : vector<16xf32> to vector<1x16xf32>
    %cst_29 = arith.constant 6.400000e+01 : f32
    %166 = vector.broadcast %cst_29 : f32 to vector<1x16xf32>
    %167 = arith.divf %165, %166 : vector<1x16xf32>
    %168 = vector.broadcast %167 : vector<1x16xf32> to vector<64x16xf32>
    %169 = arith.subf %163, %168 : vector<64x16xf32>
    %170 = arith.mulf %169, %169 : vector<64x16xf32>
    %cst_30 = arith.constant dense<0.000000e+00> : vector<16xf32>
    %171 = vector.multi_reduction <add>, %170, %cst_30 [0] : vector<64x16xf32> to vector<16xf32>
    %172 = vector.shape_cast %171 : vector<16xf32> to vector<1x16xf32>
    %cst_31 = arith.constant 6.400000e+01 : f32
    %173 = vector.broadcast %cst_31 : f32 to vector<1x16xf32>
    %174 = arith.divf %172, %173 : vector<1x16xf32>
    %c0_32 = arith.constant 0 : index
    %c0_33 = arith.constant 0 : index
    %175 = vector.load %arg5[%c0_32, %c0_33] : memref<1x16xf32, #tpu.memory_space<vmem>>, vector<1x16xf32>
    %cst_34 = arith.constant 9.99999974E-6 : f32
    %176 = vector.broadcast %cst_34 : f32 to vector<1x16xf32>
    %177 = arith.addf %174, %176 : vector<1x16xf32>
    %178 = math.rsqrt %177 : vector<1x16xf32>
    %179 = arith.mulf %175, %178 : vector<1x16xf32>
    %c0_35 = arith.constant 0 : index
    %c0_36 = arith.constant 0 : index
    %180 = vector.load %arg6[%c0_35, %c0_36] : memref<1x16xf32, #tpu.memory_space<vmem>>, vector<1x16xf32>
    %181 = arith.mulf %167, %179 : vector<1x16xf32>
    %182 = arith.subf %180, %181 : vector<1x16xf32>
    %183 = vector.broadcast %179 : vector<1x16xf32> to vector<64x16xf32>
    %184 = arith.mulf %163, %183 : vector<64x16xf32>
    %185 = vector.broadcast %182 : vector<1x16xf32> to vector<64x16xf32>
    %186 = arith.addf %184, %185 : vector<64x16xf32>
    %cst_37 = arith.constant 0.000000e+00 : f32
    %187 = vector.broadcast %cst_37 : f32 to vector<64x16xf32>
    %188 = arith.maximumf %186, %187 : vector<64x16xf32>
    %c0_38 = arith.constant 0 : index
    %c0_39 = arith.constant 0 : index
    %189 = memref.load %arg8[%c0_38, %c0_39] : memref<1x1xf32, #tpu.memory_space<smem>>
    %c0_40 = arith.constant 0 : index
    %c0_41 = arith.constant 0 : index
    %190 = vector.load %arg7[%c0_40, %c0_41] : memref<1x16xf32, #tpu.memory_space<vmem>>, vector<1x16xf32>
    %cst_42 = arith.constant dense<0.000000e+00> : vector<1x64xf32>
    %191 = tpu.matmul %190, %188, %cst_42 {dimension_numbers = #tpu.dot_dimension_numbers<[1], [1], [0], [0], [0, 0, 1, 0], [], []>} : vector<1x16xf32>, vector<64x16xf32>, vector<1x64xf32> -> vector<1x64xf32>
    %192 = vector.broadcast %189 : f32 to vector<1x64xf32>
    %193 = arith.addf %191, %192 : vector<1x64xf32>
    %c0_43 = arith.constant 0 : index
    %c0_44 = arith.constant 0 : index
    %194 = vector.load %arg9[%c0_43, %c0_44] : memref<1x64xf32, #tpu.memory_space<vmem>>, vector<1x64xf32>
    tpu.vector_store %arg9[%c0_43, %c0_44], %193 {strides = array<i32>} : memref<1x64xf32, #tpu.memory_space<vmem>>, vector<1x64xf32>,
    return
  }
}

</mosaic_0001>

<llo_original>
// kernel: tpu_custom_call.1
$region0: #{tpu_custom_call.1}
  #allocation0 [shape = 'u32[]', space=smem, size = 0x4, offset = 0x4, fixed_abs, tag = 'smem constant byte address 0x4 - core index']
  #allocation1 [shape = 'u32[144,128]{1,0:T(1,128)}', space=vmem, size = 0x12000, scoped, tag = 'internal scratch']
  #allocation2 [shape = 'f32[1,1]{1,0:T(1,128)S(6)}', space=smem, size = 0x200, scoped, tag = 'scoped memory for tpu_custom_call.1']
  %s0 = inlined_call_operand.vmem [shape: f32[64,4], index: 0, kind: input, shape index: {}]
  %s1 = inlined_call_operand.vmem [shape: f32[4,128], index: 1, kind: input, shape index: {}]
  %s2 = inlined_call_operand.vmem [shape: f32[32,128], index: 2, kind: input, shape index: {}]
  %s3 = inlined_call_operand.vmem [shape: f32[1,128], index: 3, kind: input, shape index: {}]
  %s4 = inlined_call_operand.vmem [shape: f32[32,16], index: 4, kind: input, shape index: {}]
  %s5 = inlined_call_operand.vmem [shape: f32[1,16], index: 5, kind: input, shape index: {}]
  %s6 = inlined_call_operand.vmem [shape: f32[1,16], index: 6, kind: input, shape index: {}]
  %s7 = inlined_call_operand.vmem [shape: f32[1,16], index: 7, kind: input, shape index: {}]
  %s8 = inlined_call_operand.<no memory space> [shape: f32[1,1], index: 8, kind: input, shape index: {}]
  %s9 = inlined_call_operand.hbm [shape: f32[1,64], index: 9, kind: output, shape index: {}]
  %s10 = sld [smem:[#allocation0]]
  $region46: #{tpu_custom_call.1} parent=0
    _
  %s12 = ssub.s32 1, %s10
  %s13 = scalar_select 0, %s12, %s10
  %14 = sst [smem:[#allocation2]] %s8
  $region1: #{tpu_custom_call.1} parent=0
    #allocation3 [shape = 'u8[512]{0}', space=vmem, size = 0x400, scoped, tag = 'output window, operand 0, single buffered']
    #allocation4 [shape = 's32[1]{0}', space=sflag, size = 0x4, scoped, tag = 'scoped memory for tpu_custom_call.1']
    %15 = vsyncpa [#allocation4], 0
    // Predicated region
    $region2: #{tpu_custom_call.1} parent=1 // pred_check
      _
    $region3: #{tpu_custom_call.1} parent=1 // pred_check_branch
      %17 = sbr.rel (0) target = $region5
    $region4: #{tpu_custom_call.1} parent=1 // pred_region
      _
    $region5: #{tpu_custom_call.1} parent=1 // pred_fallthru
      _
    // Predicated region
    $region6: #{tpu_custom_call.1} parent=1 // pred_check
      _
    $region7: #{tpu_custom_call.1} parent=1 // pred_check_branch
      %19 = sbr.rel (0) target = $region9
    $region8: #{tpu_custom_call.1} parent=1 // pred_region
      _
    $region9: #{tpu_custom_call.1} parent=1 // pred_fallthru
      _
    // Predicated region
    $region10: #{tpu_custom_call.1} parent=1 // pred_check
      _
    $region11: #{tpu_custom_call.1} parent=1 // pred_check_branch
      %21 = sbr.rel (0) target = $region13
    $region12: #{tpu_custom_call.1} parent=1 // pred_region
      _
    $region13: #{tpu_custom_call.1} parent=1 // pred_fallthru
      _
    // Predicated region
    $region14: #{tpu_custom_call.1} parent=1 // pred_check
      _
    $region15: #{tpu_custom_call.1} parent=1 // pred_check_branch
      %23 = sbr.rel (0) target = $region17
    $region16: #{tpu_custom_call.1} parent=1 // pred_region
      _
    $region17: #{tpu_custom_call.1} parent=1 // pred_fallthru
      _
    // Predicated region
    $region18: #{tpu_custom_call.1} parent=1 // pred_check
      _
    $region19: #{tpu_custom_call.1} parent=1 // pred_check_branch
      %25 = sbr.rel (0) target = $region21
    $region20: #{tpu_custom_call.1} parent=1 // pred_region
      _
    $region21: #{tpu_custom_call.1} parent=1 // pred_fallthru
      _
    // Predicated region
    $region22: #{tpu_custom_call.1} parent=1 // pred_check
      _
    $region23: #{tpu_custom_call.1} parent=1 // pred_check_branch
      %27 = sbr.rel (0) target = $region25
    $region24: #{tpu_custom_call.1} parent=1 // pred_region
      _
    $region25: #{tpu_custom_call.1} parent=1 // pred_fallthru
      _
    // Predicated region
    $region26: #{tpu_custom_call.1} parent=1 // pred_check
      _
    $region27: #{tpu_custom_call.1} parent=1 // pred_check_branch
      %29 = sbr.rel (0) target = $region29
    $region28: #{tpu_custom_call.1} parent=1 // pred_region
      _
    $region29: #{tpu_custom_call.1} parent=1 // pred_fallthru
      _
    // Predicated region
    $region30: #{tpu_custom_call.1} parent=1 // pred_check
      _
    $region31: #{tpu_custom_call.1} parent=1 // pred_check_branch
      %31 = sbr.rel (0) target = $region33
    $region32: #{tpu_custom_call.1} parent=1 // pred_region
      _
    $region33: #{tpu_custom_call.1} parent=1 // pred_fallthru
      _
    // Predicated region
    $region34: #{tpu_custom_call.1} parent=1 // pred_check
      _
    $region35: #{tpu_custom_call.1} parent=1 // pred_check_branch
      %33 = sbr.rel (0) target = $region37
    $region36: #{tpu_custom_call.1} parent=1 // pred_region
      _
    $region37: #{tpu_custom_call.1} parent=1 // pred_fallthru
      _
    %v34 = vld [vmem:[%s0] sm:$0xff]
    %v35 = vld [vmem:[%s0 + $0x8] sm:$0xff]
    %v36 = vld [vmem:[%s0 + $0x10] sm:$0xff]
    %v37 = vld [vmem:[%s0 + $0x18] sm:$0xff]
    %v38 = vld [vmem:[%s0 + $0x20] sm:$0xff]
    %v39 = vld [vmem:[%s0 + $0x28] sm:$0xff]
    %v40 = vld [vmem:[%s0 + $0x30] sm:$0xff]
    %v41 = vld [vmem:[%s0 + $0x38] sm:$0xff]
    %v42 = vld [vmem:[%s1] sm:$0xf]
    %v43 = vld [vmem:[%s3] sm:$0x1]
    %v45 = vlaneseq
    %v46 = vshrl.u32 %v45, 7
    %v47 = vsub.s32 0, %v46
    %v48 = vrot.slane %v43, %v47
    %vm50 = vcmask 31744
    %v52 = vsel %vm50, %v34, 0
    %v55 = vsel %vm50, %v35, 0
    %v58 = vsel %vm50, %v36, 0
    %v61 = vsel %vm50, %v37, 0
    %v64 = vsel %vm50, %v38, 0
    %v67 = vsel %vm50, %v39, 0
    %v70 = vsel %vm50, %v40, 0
    %v73 = vsel %vm50, %v41, 0
    %vm75 = vcmask 1043456
    %v77 = vsel %vm75, %v42, 0
    %79 = vmatprep.subr.mxu0 0.0
    %80 = vmatpush1.msra.mxu0 0.0
    %81 = vmatprep.subr.mxu0 0.0
    %82 = vmatpush1.msra.mxu0 0.0
    %83 = vmatprep.subr.mxu0 0.0
    %84 = vmatpush1.msra.mxu0 0.0
    %85 = vmatprep.subr.mxu0 0.0
    %86 = vmatpush1.msra.mxu0 0.0
    %87 = vmatprep.subr.mxu0 0.0
    %88 = vmatpush1.msra.mxu0 0.0
    %89 = vmatprep.subr.mxu0 0.0
    %90 = vmatpush1.msra.mxu0 0.0
    %91 = vmatprep.subr.mxu0 0.0
    %92 = vmatpush1.msra.mxu0 0.0
    %93 = vmatprep.subr.mxu0 0.0
    %94 = vmatpush1.msra.mxu0 0.0
    %95 = vmatprep.subr.mxu0 0.0
    %96 = vmatpush1.msra.mxu0 0.0
    %97 = vmatprep.subr.mxu0 0.0
    %98 = vmatpush1.msra.mxu0 0.0
    %99 = vmatprep.subr.mxu0 0.0
    %100 = vmatpush1.msra.mxu0 0.0
    %101 = vmatprep.subr.mxu0 0.0
    %102 = vmatpush1.msra.mxu0 0.0
    %103 = vmatprep.subr.mxu0 0.0
    %104 = vmatpush1.msra.mxu0 0.0
    %105 = vmatprep.subr.mxu0 0.0
    %106 = vmatpush1.msra.mxu0 0.0
    %107 = vmatprep.subr.mxu0 0.0
    %108 = vmatpush1.msra.mxu0 0.0
    %109 = vmatprep.subr.mxu0 0.0
    %110 = vmatpush1.msra.mxu0 %v77
    %111 = vmatprep.subr.mxu0 0.0
    %112 = vmatpush2.msra.mxu0 0.0
    %113 = vmatprep.subr.mxu0 0.0
    %114 = vmatpush2.msra.mxu0 0.0
    %115 = vmatprep.subr.mxu0 0.0
    %116 = vmatpush2.msra.mxu0 0.0
    %117 = vmatprep.subr.mxu0 0.0
    %118 = vmatpush2.msra.mxu0 0.0
    %119 = vmatprep.subr.mxu0 0.0
    %120 = vmatpush2.msra.mxu0 0.0
    %121 = vmatprep.subr.mxu0 0.0
    %122 = vmatpush2.msra.mxu0 0.0
    %123 = vmatprep.subr.mxu0 0.0
    %124 = vmatpush2.msra.mxu0 0.0
    %125 = vmatprep.subr.mxu0 0.0
    %126 = vmatpush2.msra.mxu0 0.0
    %127 = vmatprep.subr.mxu0 0.0
    %128 = vmatpush2.msra.mxu0 0.0
    %129 = vmatprep.subr.mxu0 0.0
    %130 = vmatpush2.msra.mxu0 0.0
    %131 = vmatprep.subr.mxu0 0.0
    %132 = vmatpush2.msra.mxu0 0.0
    %133 = vmatprep.subr.mxu0 0.0
    %134 = vmatpush2.msra.mxu0 0.0
    %135 = vmatprep.subr.mxu0 0.0
    %136 = vmatpush2.msra.mxu0 0.0
    %137 = vmatprep.subr.mxu0 0.0
    %138 = vmatpush2.msra.mxu0 0.0
    %139 = vmatprep.subr.mxu0 0.0
    %140 = vmatpush2.msra.mxu0 0.0
    %141 = vmatprep.subr.mxu0 0.0
    %142 = vmatpush2.msra.mxu0 0.0
    %143 = vmatprep.mubr.f32.mxu0 0.0
    %144 = vmatmul.mubr.f32.gmra.mxu0 %v52
    %v145 = vpop.f32.mrf.mxu0
    %v146 = vadd.f32 %v48, %v145
    %v147 = vpop.f32.mrf.mxu0
    %148 = vmatprep.mubr.f32.mxu0 0.0
    %149 = vmatmul.mubr.f32.gmra.mxu0 %v55
    %v150 = vpop.f32.mrf.mxu0
    %v151 = vadd.f32 %v48, %v150
    %v152 = vpop.f32.mrf.mxu0
    %153 = vmatprep.mubr.f32.mxu0 0.0
    %154 = vmatmul.mubr.f32.gmra.mxu0 %v58
    %v155 = vpop.f32.mrf.mxu0
    %v156 = vadd.f32 %v48, %v155
    %v157 = vpop.f32.mrf.mxu0
    %158 = vmatprep.mubr.f32.mxu0 0.0
    %159 = vmatmul.mubr.f32.gmra.mxu0 %v61
    %v160 = vpop.f32.mrf.mxu0
    %v161 = vadd.f32 %v48, %v160
    %v162 = vpop.f32.mrf.mxu0
    %163 = vmatprep.mubr.f32.mxu0 0.0
    %164 = vmatmul.mubr.f32.gmra.mxu0 %v64
    %v165 = vpop.f32.mrf.mxu0
    %v166 = vadd.f32 %v48, %v165
    %v167 = vpop.f32.mrf.mxu0
    %168 = vmatprep.mubr.f32.mxu0 0.0
    %169 = vmatmul.mubr.f32.gmra.mxu0 %v67
    %v170 = vpop.f32.mrf.mxu0
    %v171 = vadd.f32 %v48, %v170
    %v172 = vpop.f32.mrf.mxu0
    %173 = vmatprep.mubr.f32.mxu0 0.0
    %174 = vmatmul.mubr.f32.gmra.mxu0 %v70
    %v175 = vpop.f32.mrf.mxu0
    %v176 = vadd.f32 %v48, %v175
    %v177 = vpop.f32.mrf.mxu0
    %178 = vmatprep.mubr.f32.mxu0 0.0
    %179 = vmatmul.mubr.f32.gmra.mxu0 %v73
    %v180 = vpop.f32.mrf.mxu0
    %v181 = vadd.f32 %v48, %v180
    %v182 = vpop.f32.mrf.mxu0
    %183 = vdwg.mxu0
    %v184 = vld [vmem:[%s2] sm:$0xff]
    %v185 = vld [vmem:[%s2 + $0x8] sm:$0xff]
    %v186 = vld [vmem:[%s2 + $0x10] sm:$0xff]
    %v187 = vld [vmem:[%s2 + $0x18] sm:$0xff]
    %vm188 = vcmask 261120
    %v190 = vsel %vm188, 0.0, 0
    %192 = vmatprep.subr.mxu0 0.0
    %193 = vmatpush1.msra.mxu0 0.0
    %194 = vmatprep.subr.mxu0 0.0
    %195 = vmatpush1.msra.mxu0 0.0
    %196 = vmatprep.subr.mxu0 0.0
    %197 = vmatpush1.msra.mxu0 0.0
    %198 = vmatprep.subr.mxu0 0.0
    %199 = vmatpush1.msra.mxu0 0.0
    %200 = vmatprep.subr.mxu0 0.0
    %201 = vmatpush1.msra.mxu0 0.0
    %202 = vmatprep.subr.mxu0 0.0
    %203 = vmatpush1.msra.mxu0 0.0
    %204 = vmatprep.subr.mxu0 0.0
    %205 = vmatpush1.msra.mxu0 0.0
    %206 = vmatprep.subr.mxu0 0.0
    %207 = vmatpush1.msra.mxu0 0.0
    %208 = vmatprep.subr.mxu0 0.0
    %209 = vmatpush1.msra.mxu0 0.0
    %210 = vmatprep.subr.mxu0 0.0
    %211 = vmatpush1.msra.mxu0 0.0
    %212 = vmatprep.subr.mxu0 0.0
    %213 = vmatpush1.msra.mxu0 0.0
    %214 = vmatprep.subr.mxu0 0.0
    %215 = vmatpush1.msra.mxu0 0.0
    %216 = vmatprep.subr.mxu0 0.0
    %217 = vmatpush1.msra.mxu0 %v187
    %218 = vmatprep.subr.mxu0 0.0
    %219 = vmatpush1.msra.mxu0 %v186
    %220 = vmatprep.subr.mxu0 0.0
    %221 = vmatpush1.msra.mxu0 %v185
    %222 = vmatprep.subr.mxu0 0.0
    %223 = vmatpush1.msra.mxu0 %v184
    %224 = vmatprep.subr.mxu0 0.0
    %225 = vmatpush2.msra.mxu0 0.0
    %226 = vmatprep.subr.mxu0 0.0
    %227 = vmatpush2.msra.mxu0 0.0
    %228 = vmatprep.subr.mxu0 0.0
    %229 = vmatpush2.msra.mxu0 0.0
    %230 = vmatprep.subr.mxu0 0.0
    %231 = vmatpush2.msra.mxu0 0.0
    %232 = vmatprep.subr.mxu0 0.0
    %233 = vmatpush2.msra.mxu0 0.0
    %234 = vmatprep.subr.mxu0 0.0
    %235 = vmatpush2.msra.mxu0 0.0
    %236 = vmatprep.subr.mxu0 0.0
    %237 = vmatpush2.msra.mxu0 0.0
    %238 = vmatprep.subr.mxu0 0.0
    %239 = vmatpush2.msra.mxu0 0.0
    %240 = vmatprep.subr.mxu0 0.0
    %241 = vmatpush2.msra.mxu0 0.0
    %242 = vmatprep.subr.mxu0 0.0
    %243 = vmatpush2.msra.mxu0 0.0
    %244 = vmatprep.subr.mxu0 0.0
    %245 = vmatpush2.msra.mxu0 0.0
    %246 = vmatprep.subr.mxu0 0.0
    %247 = vmatpush2.msra.mxu0 0.0
    %248 = vmatprep.subr.mxu0 0.0
    %249 = vmatpush2.msra.mxu0 0.0
    %250 = vmatprep.subr.mxu0 0.0
    %251 = vmatpush2.msra.mxu0 0.0
    %252 = vmatprep.subr.mxu0 0.0
    %253 = vmatpush2.msra.mxu0 0.0
    %254 = vmatprep.subr.mxu0 0.0
    %255 = vmatpush2.msra.mxu0 0.0
    %256 = vmatprep.mubr.f32.mxu0 0.0
    %257 = vmatmul.mubr.f32.gmra.mxu0 %v190
    %v258 = vpop.f32.mrf.mxu0
    %v259 = vadd.f32 0.0, %v258
    %v260 = vpop.f32.mrf.mxu0
    %261 = vdwg.mxu0
    %v262 = vadd.f32 %v146, %v259
    %v263 = vxor.u32 %v262, 2147483648
    %v264 = vmul.f32 %v263, 1.442695
    %v265 = vpow.pop %v264
    %v266 = vadd.f32 %v265, 1.0
    %v267 = vrcp.pop %v266
    %v268 = vmul.f32 1.0, %v267
    %v269 = vtanh.pop %v262
    %v270 = vmul.f32 %v268, 0.0
    %272 = vrot.lane.b32.xlu0 %v269, 32
    %v273 = vpop.permute.xlu0 %272
    %v275 = vmul.f32 %v268, %v273
    %277 = vrot.lane.b32.xlu0 %v275, 32
    %v278 = vpop.permute.xlu0 %277
    %v280 = vadd.f32 %v270, %v278
    %v281 = vtanh.pop %v280
    %283 = vrot.lane.b32.xlu0 %v281, 32
    %v284 = vpop.permute.xlu0 %283
    %v286 = vmul.f32 %v268, %v284
    %288 = vrot.lane.b32.xlu0 %v286, 64
    %v289 = vpop.permute.xlu0 %288
    %v290 = vsel %vm188, %v289, 0
    %292 = vmatprep.subr.mxu0 0.0
    %293 = vmatpush1.msra.mxu0 0.0
    %294 = vmatprep.subr.mxu0 0.0
    %295 = vmatpush1.msra.mxu0 0.0
    %296 = vmatprep.subr.mxu0 0.0
    %297 = vmatpush1.msra.mxu0 0.0
    %298 = vmatprep.subr.mxu0 0.0
    %299 = vmatpush1.msra.mxu0 0.0
    %300 = vmatprep.subr.mxu0 0.0
    %301 = vmatpush1.msra.mxu0 0.0
    %302 = vmatprep.subr.mxu0 0.0
    %303 = vmatpush1.msra.mxu0 0.0
    %304 = vmatprep.subr.mxu0 0.0
    %305 = vmatpush1.msra.mxu0 0.0
    %306 = vmatprep.subr.mxu0 0.0
    %307 = vmatpush1.msra.mxu0 0.0
    %308 = vmatprep.subr.mxu0 0.0
    %309 = vmatpush1.msra.mxu0 0.0
    %310 = vmatprep.subr.mxu0 0.0
    %311 = vmatpush1.msra.mxu0 0.0
    %312 = vmatprep.subr.mxu0 0.0
    %313 = vmatpush1.msra.mxu0 0.0
    %314 = vmatprep.subr.mxu0 0.0
    %315 = vmatpush1.msra.mxu0 0.0
    %316 = vmatprep.subr.mxu0 0.0
    %317 = vmatpush1.msra.mxu0 %v187
    %318 = vmatprep.subr.mxu0 0.0
    %319 = vmatpush1.msra.mxu0 %v186
    %320 = vmatprep.subr.mxu0 0.0
    %321 = vmatpush1.msra.mxu0 %v185
    %322 = vmatprep.subr.mxu0 0.0
    %323 = vmatpush1.msra.mxu0 %v184
    %324 = vmatprep.subr.mxu0 0.0
    %325 = vmatpush2.msra.mxu0 0.0
    %326 = vmatprep.subr.mxu0 0.0
    %327 = vmatpush2.msra.mxu0 0.0
    %328 = vmatprep.subr.mxu0 0.0
    %329 = vmatpush2.msra.mxu0 0.0
    %330 = vmatprep.subr.mxu0 0.0
    %331 = vmatpush2.msra.mxu0 0.0
    %332 = vmatprep.subr.mxu0 0.0
    %333 = vmatpush2.msra.mxu0 0.0
    %334 = vmatprep.subr.mxu0 0.0
    %335 = vmatpush2.msra.mxu0 0.0
    %336 = vmatprep.subr.mxu0 0.0
    %337 = vmatpush2.msra.mxu0 0.0
    %338 = vmatprep.subr.mxu0 0.0
    %339 = vmatpush2.msra.mxu0 0.0
    %340 = vmatprep.subr.mxu0 0.0
    %341 = vmatpush2.msra.mxu0 0.0
    %342 = vmatprep.subr.mxu0 0.0
    %343 = vmatpush2.msra.mxu0 0.0
    %344 = vmatprep.subr.mxu0 0.0
    %345 = vmatpush2.msra.mxu0 0.0
    %346 = vmatprep.subr.mxu0 0.0
    %347 = vmatpush2.msra.mxu0 0.0
    %348 = vmatprep.subr.mxu0 0.0
    %349 = vmatpush2.msra.mxu0 0.0
    %350 = vmatprep.subr.mxu0 0.0
    %351 = vmatpush2.msra.mxu0 0.0
    %352 = vmatprep.subr.mxu0 0.0
    %353 = vmatpush2.msra.mxu0 0.0
    %354 = vmatprep.subr.mxu0 0.0
    %355 = vmatpush2.msra.mxu0 0.0
    %356 = vmatprep.mubr.f32.mxu0 0.0
    %357 = vmatmul.mubr.f32.gmra.mxu0 %v290
    %v358 = vpop.f32.mrf.mxu0
    %v359 = vadd.f32 0.0, %v358
    %v360 = vpop.f32.mrf.mxu0
    %361 = vdwg.mxu0
    %v362 = vadd.f32 %v151, %v359
    %v363 = vxor.u32 %v362, 2147483648
    %v364 = vmul.f32 %v363, 1.442695
    %v365 = vpow.pop %v364
    %v366 = vadd.f32 %v365, 1.0
    %v367 = vrcp.pop %v366
    %v368 = vmul.f32 1.0, %v367
    %v369 = vtanh.pop %v362
    %v370 = vmul.f32 %v368, %v280
    %372 = vrot.lane.b32.xlu0 %v369, 32
    %v373 = vpop.permute.xlu0 %372
    %v375 = vmul.f32 %v368, %v373
    %377 = vrot.lane.b32.xlu0 %v375, 32
    %v378 = vpop.permute.xlu0 %377
    %v380 = vadd.f32 %v370, %v378
    %v381 = vtanh.pop %v380
    %383 = vrot.lane.b32.xlu0 %v381, 32
    %v384 = vpop.permute.xlu0 %383
    %v386 = vmul.f32 %v368, %v384
    %388 = vrot.lane.b32.xlu0 %v386, 64
    %v389 = vpop.permute.xlu0 %388
    %v390 = vsel %vm188, %v389, 0
    %392 = vmatprep.subr.mxu0 0.0
    %393 = vmatpush1.msra.mxu0 0.0
    %394 = vmatprep.subr.mxu0 0.0
    %395 = vmatpush1.msra.mxu0 0.0
    %396 = vmatprep.subr.mxu0 0.0
    %397 = vmatpush1.msra.mxu0 0.0
    %398 = vmatprep.subr.mxu0 0.0
    %399 = vmatpush1.msra.mxu0 0.0
    %400 = vmatprep.subr.mxu0 0.0
    %401 = vmatpush1.msra.mxu0 0.0
    %402 = vmatprep.subr.mxu0 0.0
    %403 = vmatpush1.msra.mxu0 0.0
    %404 = vmatprep.subr.mxu0 0.0
    %405 = vmatpush1.msra.mxu0 0.0
    %406 = vmatprep.subr.mxu0 0.0
    %407 = vmatpush1.msra.mxu0 0.0
    %408 = vmatprep.subr.mxu0 0.0
    %409 = vmatpush1.msra.mxu0 0.0
    %410 = vmatprep.subr.mxu0 0.0
    %411 = vmatpush1.msra.mxu0 0.0
    %412 = vmatprep.subr.mxu0 0.0
    %413 = vmatpush1.msra.mxu0 0.0
    %414 = vmatprep.subr.mxu0 0.0
    %415 = vmatpush1.msra.mxu0 0.0
    %416 = vmatprep.subr.mxu0 0.0
    %417 = vmatpush1.msra.mxu0 %v187
    %418 = vmatprep.subr.mxu0 0.0
    %419 = vmatpush1.msra.mxu0 %v186
    %420 = vmatprep.subr.mxu0 0.0
    %421 = vmatpush1.msra.mxu0 %v185
    %422 = vmatprep.subr.mxu0 0.0
    %423 = vmatpush1.msra.mxu0 %v184
    %424 = vmatprep.subr.mxu0 0.0
    %425 = vmatpush2.msra.mxu0 0.0
    %426 = vmatprep.subr.mxu0 0.0
    %427 = vmatpush2.msra.mxu0 0.0
    %428 = vmatprep.subr.mxu0 0.0
    %429 = vmatpush2.msra.mxu0 0.0
    %430 = vmatprep.subr.mxu0 0.0
    %431 = vmatpush2.msra.mxu0 0.0
    %432 = vmatprep.subr.mxu0 0.0
    %433 = vmatpush2.msra.mxu0 0.0
    %434 = vmatprep.subr.mxu0 0.0
    %435 = vmatpush2.msra.mxu0 0.0
    %436 = vmatprep.subr.mxu0 0.0
    %437 = vmatpush2.msra.mxu0 0.0
    %438 = vmatprep.subr.mxu0 0.0
    %439 = vmatpush2.msra.mxu0 0.0
    %440 = vmatprep.subr.mxu0 0.0
    %441 = vmatpush2.msra.mxu0 0.0
    %442 = vmatprep.subr.mxu0 0.0
    %443 = vmatpush2.msra.mxu0 0.0
    %444 = vmatprep.subr.mxu0 0.0
    %445 = vmatpush2.msra.mxu0 0.0
    %446 = vmatprep.subr.mxu0 0.0
    %447 = vmatpush2.msra.mxu0 0.0
    %448 = vmatprep.subr.mxu0 0.0
    %449 = vmatpush2.msra.mxu0 0.0
    %450 = vmatprep.subr.mxu0 0.0
    %451 = vmatpush2.msra.mxu0 0.0
    %452 = vmatprep.subr.mxu0 0.0
    %453 = vmatpush2.msra.mxu0 0.0
    %454 = vmatprep.subr.mxu0 0.0
    %455 = vmatpush2.msra.mxu0 0.0
    %456 = vmatprep.mubr.f32.mxu0 0.0
    %457 = vmatmul.mubr.f32.gmra.mxu0 %v390
    %v458 = vpop.f32.mrf.mxu0
    %v459 = vadd.f32 0.0, %v458
    %v460 = vpop.f32.mrf.mxu0
    %461 = vdwg.mxu0
    %v462 = vadd.f32 %v156, %v459
    %v463 = vxor.u32 %v462, 2147483648
    %v464 = vmul.f32 %v463, 1.442695
    %v465 = vpow.pop %v464
    %v466 = vadd.f32 %v465, 1.0
    %v467 = vrcp.pop %v466
    %v468 = vmul.f32 1.0, %v467
    %v469 = vtanh.pop %v462
    %v470 = vmul.f32 %v468, %v380
    %472 = vrot.lane.b32.xlu0 %v469, 32
    %v473 = vpop.permute.xlu0 %472
    %v475 = vmul.f32 %v468, %v473
    %477 = vrot.lane.b32.xlu0 %v475, 32
    %v478 = vpop.permute.xlu0 %477
    %v480 = vadd.f32 %v470, %v478
    %v481 = vtanh.pop %v480
    %483 = vrot.lane.b32.xlu0 %v481, 32
    %v484 = vpop.permute.xlu0 %483
    %v486 = vmul.f32 %v468, %v484
    %488 = vrot.lane.b32.xlu0 %v486, 64
    %v489 = vpop.permute.xlu0 %488
    %v490 = vsel %vm188, %v489, 0
    %492 = vmatprep.subr.mxu0 0.0
    %493 = vmatpush1.msra.mxu0 0.0
    %494 = vmatprep.subr.mxu0 0.0
    %495 = vmatpush1.msra.mxu0 0.0
    %496 = vmatprep.subr.mxu0 0.0
    %497 = vmatpush1.msra.mxu0 0.0
    %498 = vmatprep.subr.mxu0 0.0
    %499 = vmatpush1.msra.mxu0 0.0
    %500 = vmatprep.subr.mxu0 0.0
    %501 = vmatpush1.msra.mxu0 0.0
    %502 = vmatprep.subr.mxu0 0.0
    %503 = vmatpush1.msra.mxu0 0.0
    %504 = vmatprep.subr.mxu0 0.0
    %505 = vmatpush1.msra.mxu0 0.0
    %506 = vmatprep.subr.mxu0 0.0
    %507 = vmatpush1.msra.mxu0 0.0
    %508 = vmatprep.subr.mxu0 0.0
    %509 = vmatpush1.msra.mxu0 0.0
    %510 = vmatprep.subr.mxu0 0.0
    %511 = vmatpush1.msra.mxu0 0.0
    %512 = vmatprep.subr.mxu0 0.0
    %513 = vmatpush1.msra.mxu0 0.0
    %514 = vmatprep.subr.mxu0 0.0
    %515 = vmatpush1.msra.mxu0 0.0
    %516 = vmatprep.subr.mxu0 0.0
    %517 = vmatpush1.msra.mxu0 %v187
    %518 = vmatprep.subr.mxu0 0.0
    %519 = vmatpush1.msra.mxu0 %v186
    %520 = vmatprep.subr.mxu0 0.0
    %521 = vmatpush1.msra.mxu0 %v185
    %522 = vmatprep.subr.mxu0 0.0
    %523 = vmatpush1.msra.mxu0 %v184
    %524 = vmatprep.subr.mxu0 0.0
    %525 = vmatpush2.msra.mxu0 0.0
    %526 = vmatprep.subr.mxu0 0.0
    %527 = vmatpush2.msra.mxu0 0.0
    %528 = vmatprep.subr.mxu0 0.0
    %529 = vmatpush2.msra.mxu0 0.0
    %530 = vmatprep.subr.mxu0 0.0
    %531 = vmatpush2.msra.mxu0 0.0
    %532 = vmatprep.subr.mxu0 0.0
    %533 = vmatpush2.msra.mxu0 0.0
    %534 = vmatprep.subr.mxu0 0.0
    %535 = vmatpush2.msra.mxu0 0.0
    %536 = vmatprep.subr.mxu0 0.0
    %537 = vmatpush2.msra.mxu0 0.0
    %538 = vmatprep.subr.mxu0 0.0
    %539 = vmatpush2.msra.mxu0 0.0
    %540 = vmatprep.subr.mxu0 0.0
    %541 = vmatpush2.msra.mxu0 0.0
    %542 = vmatprep.subr.mxu0 0.0
    %543 = vmatpush2.msra.mxu0 0.0
    %544 = vmatprep.subr.mxu0 0.0
    %545 = vmatpush2.msra.mxu0 0.0
    %546 = vmatprep.subr.mxu0 0.0
    %547 = vmatpush2.msra.mxu0 0.0
    %548 = vmatprep.subr.mxu0 0.0
    %549 = vmatpush2.msra.mxu0 0.0
    %550 = vmatprep.subr.mxu0 0.0
    %551 = vmatpush2.msra.mxu0 0.0
    %552 = vmatprep.subr.mxu0 0.0
    %553 = vmatpush2.msra.mxu0 0.0
    %554 = vmatprep.subr.mxu0 0.0
    %555 = vmatpush2.msra.mxu0 0.0
    %556 = vmatprep.mubr.f32.mxu0 0.0
    %557 = vmatmul.mubr.f32.gmra.mxu0 %v490
    %v558 = vpop.f32.mrf.mxu0
    %v559 = vadd.f32 0.0, %v558
    %v560 = vpop.f32.mrf.mxu0
    %561 = vdwg.mxu0
    %v562 = vadd.f32 %v161, %v559
    %v563 = vxor.u32 %v562, 2147483648
    %v564 = vmul.f32 %v563, 1.442695
    %v565 = vpow.pop %v564
    %v566 = vadd.f32 %v565, 1.0
    %v567 = vrcp.pop %v566
    %v568 = vmul.f32 1.0, %v567
    %v569 = vtanh.pop %v562
    %v570 = vmul.f32 %v568, %v480
    %572 = vrot.lane.b32.xlu0 %v569, 32
    %v573 = vpop.permute.xlu0 %572
    %v575 = vmul.f32 %v568, %v573
    %577 = vrot.lane.b32.xlu0 %v575, 32
    %v578 = vpop.permute.xlu0 %577
    %v580 = vadd.f32 %v570, %v578
    %v581 = vtanh.pop %v580
    %583 = vrot.lane.b32.xlu0 %v581, 32
    %v584 = vpop.permute.xlu0 %583
    %v586 = vmul.f32 %v568, %v584
    %588 = vrot.lane.b32.xlu0 %v586, 64
    %v589 = vpop.permute.xlu0 %588
    %v590 = vsel %vm188, %v589, 0
    %592 = vmatprep.subr.mxu0 0.0
    %593 = vmatpush1.msra.mxu0 0.0
    %594 = vmatprep.subr.mxu0 0.0
    %595 = vmatpush1.msra.mxu0 0.0
    %596 = vmatprep.subr.mxu0 0.0
    %597 = vmatpush1.msra.mxu0 0.0
    %598 = vmatprep.subr.mxu0 0.0
    %599 = vmatpush1.msra.mxu0 0.0
    %600 = vmatprep.subr.mxu0 0.0
    %601 = vmatpush1.msra.mxu0 0.0
    %602 = vmatprep.subr.mxu0 0.0
    %603 = vmatpush1.msra.mxu0 0.0
    %604 = vmatprep.subr.mxu0 0.0
    %605 = vmatpush1.msra.mxu0 0.0
    %606 = vmatprep.subr.mxu0 0.0
    %607 = vmatpush1.msra.mxu0 0.0
    %608 = vmatprep.subr.mxu0 0.0
    %609 = vmatpush1.msra.mxu0 0.0
    %610 = vmatprep.subr.mxu0 0.0
    %611 = vmatpush1.msra.mxu0 0.0
    %612 = vmatprep.subr.mxu0 0.0
    %613 = vmatpush1.msra.mxu0 0.0
    %614 = vmatprep.subr.mxu0 0.0
    %615 = vmatpush1.msra.mxu0 0.0
    %616 = vmatprep.subr.mxu0 0.0
    %617 = vmatpush1.msra.mxu0 %v187
    %618 = vmatprep.subr.mxu0 0.0
    %619 = vmatpush1.msra.mxu0 %v186
    %620 = vmatprep.subr.mxu0 0.0
    %621 = vmatpush1.msra.mxu0 %v185
    %622 = vmatprep.subr.mxu0 0.0
    %623 = vmatpush1.msra.mxu0 %v184
    %624 = vmatprep.subr.mxu0 0.0
    %625 = vmatpush2.msra.mxu0 0.0
    %626 = vmatprep.subr.mxu0 0.0
    %627 = vmatpush2.msra.mxu0 0.0
    %628 = vmatprep.subr.mxu0 0.0
    %629 = vmatpush2.msra.mxu0 0.0
    %630 = vmatprep.subr.mxu0 0.0
    %631 = vmatpush2.msra.mxu0 0.0
    %632 = vmatprep.subr.mxu0 0.0
    %633 = vmatpush2.msra.mxu0 0.0
    %634 = vmatprep.subr.mxu0 0.0
    %635 = vmatpush2.msra.mxu0 0.0
    %636 = vmatprep.subr.mxu0 0.0
    %637 = vmatpush2.msra.mxu0 0.0
    %638 = vmatprep.subr.mxu0 0.0
    %639 = vmatpush2.msra.mxu0 0.0
    %640 = vmatprep.subr.mxu0 0.0
    %641 = vmatpush2.msra.mxu0 0.0
    %642 = vmatprep.subr.mxu0 0.0
    %643 = vmatpush2.msra.mxu0 0.0
    %644 = vmatprep.subr.mxu0 0.0
    %645 = vmatpush2.msra.mxu0 0.0
    %646 = vmatprep.subr.mxu0 0.0
    %647 = vmatpush2.msra.mxu0 0.0
    %648 = vmatprep.subr.mxu0 0.0
    %649 = vmatpush2.msra.mxu0 0.0
    %650 = vmatprep.subr.mxu0 0.0
    %651 = vmatpush2.msra.mxu0 0.0
    %652 = vmatprep.subr.mxu0 0.0
    %653 = vmatpush2.msra.mxu0 0.0
    %654 = vmatprep.subr.mxu0 0.0
    %655 = vmatpush2.msra.mxu0 0.0
    %656 = vmatprep.mubr.f32.mxu0 0.0
    %657 = vmatmul.mubr.f32.gmra.mxu0 %v590
    %v658 = vpop.f32.mrf.mxu0
    %v659 = vadd.f32 0.0, %v658
    %v660 = vpop.f32.mrf.mxu0
    %661 = vdwg.mxu0
    %v662 = vadd.f32 %v166, %v659
    %v663 = vxor.u32 %v662, 2147483648
    %v664 = vmul.f32 %v663, 1.442695
    %v665 = vpow.pop %v664
    %v666 = vadd.f32 %v665, 1.0
    %v667 = vrcp.pop %v666
    %v668 = vmul.f32 1.0, %v667
    %v669 = vtanh.pop %v662
    %v670 = vmul.f32 %v668, %v580
    %672 = vrot.lane.b32.xlu0 %v669, 32
    %v673 = vpop.permute.xlu0 %672
    %v675 = vmul.f32 %v668, %v673
    %677 = vrot.lane.b32.xlu0 %v675, 32
    %v678 = vpop.permute.xlu0 %677
    %v680 = vadd.f32 %v670, %v678
    %v681 = vtanh.pop %v680
    %683 = vrot.lane.b32.xlu0 %v681, 32
    %v684 = vpop.permute.xlu0 %683
    %v686 = vmul.f32 %v668, %v684
    %688 = vrot.lane.b32.xlu0 %v686, 64
    %v689 = vpop.permute.xlu0 %688
    %v690 = vsel %vm188, %v689, 0
    %692 = vmatprep.subr.mxu0 0.0
    %693 = vmatpush1.msra.mxu0 0.0
    %694 = vmatprep.subr.mxu0 0.0
    %695 = vmatpush1.msra.mxu0 0.0
    %696 = vmatprep.subr.mxu0 0.0
    %697 = vmatpush1.msra.mxu0 0.0
    %698 = vmatprep.subr.mxu0 0.0
    %699 = vmatpush1.msra.mxu0 0.0
    %700 = vmatprep.subr.mxu0 0.0
    %701 = vmatpush1.msra.mxu0 0.0
    %702 = vmatprep.subr.mxu0 0.0
    %703 = vmatpush1.msra.mxu0 0.0
    %704 = vmatprep.subr.mxu0 0.0
    %705 = vmatpush1.msra.mxu0 0.0
    %706 = vmatprep.subr.mxu0 0.0
    %707 = vmatpush1.msra.mxu0 0.0
    %708 = vmatprep.subr.mxu0 0.0
    %709 = vmatpush1.msra.mxu0 0.0
    %710 = vmatprep.subr.mxu0 0.0
    %711 = vmatpush1.msra.mxu0 0.0
    %712 = vmatprep.subr.mxu0 0.0
    %713 = vmatpush1.msra.mxu0 0.0
    %714 = vmatprep.subr.mxu0 0.0
    %715 = vmatpush1.msra.mxu0 0.0
    %716 = vmatprep.subr.mxu0 0.0
    %717 = vmatpush1.msra.mxu0 %v187
    %718 = vmatprep.subr.mxu0 0.0
    %719 = vmatpush1.msra.mxu0 %v186
    %720 = vmatprep.subr.mxu0 0.0
    %721 = vmatpush1.msra.mxu0 %v185
    %722 = vmatprep.subr.mxu0 0.0
    %723 = vmatpush1.msra.mxu0 %v184
    %724 = vmatprep.subr.mxu0 0.0
    %725 = vmatpush2.msra.mxu0 0.0
    %726 = vmatprep.subr.mxu0 0.0
    %727 = vmatpush2.msra.mxu0 0.0
    %728 = vmatprep.subr.mxu0 0.0
    %729 = vmatpush2.msra.mxu0 0.0
    %730 = vmatprep.subr.mxu0 0.0
    %731 = vmatpush2.msra.mxu0 0.0
    %732 = vmatprep.subr.mxu0 0.0
    %733 = vmatpush2.msra.mxu0 0.0
    %734 = vmatprep.subr.mxu0 0.0
    %735 = vmatpush2.msra.mxu0 0.0
    %736 = vmatprep.subr.mxu0 0.0
    %737 = vmatpush2.msra.mxu0 0.0
    %738 = vmatprep.subr.mxu0 0.0
    %739 = vmatpush2.msra.mxu0 0.0
    %740 = vmatprep.subr.mxu0 0.0
    %741 = vmatpush2.msra.mxu0 0.0
    %742 = vmatprep.subr.mxu0 0.0
    %743 = vmatpush2.msra.mxu0 0.0
    %744 = vmatprep.subr.mxu0 0.0
    %745 = vmatpush2.msra.mxu0 0.0
    %746 = vmatprep.subr.mxu0 0.0
    %747 = vmatpush2.msra.mxu0 0.0
    %748 = vmatprep.subr.mxu0 0.0
    %749 = vmatpush2.msra.mxu0 0.0
    %750 = vmatprep.subr.mxu0 0.0
    %751 = vmatpush2.msra.mxu0 0.0
    %752 = vmatprep.subr.mxu0 0.0
    %753 = vmatpush2.msra.mxu0 0.0
    %754 = vmatprep.subr.mxu0 0.0
    %755 = vmatpush2.msra.mxu0 0.0
    %756 = vmatprep.mubr.f32.mxu0 0.0
    %757 = vmatmul.mubr.f32.gmra.mxu0 %v690
    %v758 = vpop.f32.mrf.mxu0
    %v759 = vadd.f32 0.0, %v758
    %v760 = vpop.f32.mrf.mxu0
    %761 = vdwg.mxu0
    %v762 = vadd.f32 %v171, %v759
    %v763 = vxor.u32 %v762, 2147483648
    %v764 = vmul.f32 %v763, 1.442695
    %v765 = vpow.pop %v764
    %v766 = vadd.f32 %v765, 1.0
    %v767 = vrcp.pop %v766
    %v768 = vmul.f32 1.0, %v767
    %v769 = vtanh.pop %v762
    %v770 = vmul.f32 %v768, %v680
    %772 = vrot.lane.b32.xlu0 %v769, 32
    %v773 = vpop.permute.xlu0 %772
    %v775 = vmul.f32 %v768, %v773
    %777 = vrot.lane.b32.xlu0 %v775, 32
    %v778 = vpop.permute.xlu0 %777
    %v780 = vadd.f32 %v770, %v778
    %v781 = vtanh.pop %v780
    %783 = vrot.lane.b32.xlu0 %v781, 32
    %v784 = vpop.permute.xlu0 %783
    %v786 = vmul.f32 %v768, %v784
    %788 = vrot.lane.b32.xlu0 %v786, 64
    %v789 = vpop.permute.xlu0 %788
    %v790 = vsel %vm188, %v789, 0
    %792 = vmatprep.subr.mxu0 0.0
    %793 = vmatpush1.msra.mxu0 0.0
    %794 = vmatprep.subr.mxu0 0.0
    %795 = vmatpush1.msra.mxu0 0.0
    %796 = vmatprep.subr.mxu0 0.0
    %797 = vmatpush1.msra.mxu0 0.0
    %798 = vmatprep.subr.mxu0 0.0
    %799 = vmatpush1.msra.mxu0 0.0
    %800 = vmatprep.subr.mxu0 0.0
    %801 = vmatpush1.msra.mxu0 0.0
    %802 = vmatprep.subr.mxu0 0.0
    %803 = vmatpush1.msra.mxu0 0.0
    %804 = vmatprep.subr.mxu0 0.0
    %805 = vmatpush1.msra.mxu0 0.0
    %806 = vmatprep.subr.mxu0 0.0
    %807 = vmatpush1.msra.mxu0 0.0
    %808 = vmatprep.subr.mxu0 0.0
    %809 = vmatpush1.msra.mxu0 0.0
    %810 = vmatprep.subr.mxu0 0.0
    %811 = vmatpush1.msra.mxu0 0.0
    %812 = vmatprep.subr.mxu0 0.0
    %813 = vmatpush1.msra.mxu0 0.0
    %814 = vmatprep.subr.mxu0 0.0
    %815 = vmatpush1.msra.mxu0 0.0
    %816 = vmatprep.subr.mxu0 0.0
    %817 = vmatpush1.msra.mxu0 %v187
    %818 = vmatprep.subr.mxu0 0.0
    %819 = vmatpush1.msra.mxu0 %v186
    %820 = vmatprep.subr.mxu0 0.0
    %821 = vmatpush1.msra.mxu0 %v185
    %822 = vmatprep.subr.mxu0 0.0
    %823 = vmatpush1.msra.mxu0 %v184
    %824 = vmatprep.subr.mxu0 0.0
    %825 = vmatpush2.msra.mxu0 0.0
    %826 = vmatprep.subr.mxu0 0.0
    %827 = vmatpush2.msra.mxu0 0.0
    %828 = vmatprep.subr.mxu0 0.0
    %829 = vmatpush2.msra.mxu0 0.0
    %830 = vmatprep.subr.mxu0 0.0
    %831 = vmatpush2.msra.mxu0 0.0
    %832 = vmatprep.subr.mxu0 0.0
    %833 = vmatpush2.msra.mxu0 0.0
    %834 = vmatprep.subr.mxu0 0.0
    %835 = vmatpush2.msra.mxu0 0.0
    %836 = vmatprep.subr.mxu0 0.0
    %837 = vmatpush2.msra.mxu0 0.0
    %838 = vmatprep.subr.mxu0 0.0
    %839 = vmatpush2.msra.mxu0 0.0
    %840 = vmatprep.subr.mxu0 0.0
    %841 = vmatpush2.msra.mxu0 0.0
    %842 = vmatprep.subr.mxu0 0.0
    %843 = vmatpush2.msra.mxu0 0.0
    %844 = vmatprep.subr.mxu0 0.0
    %845 = vmatpush2.msra.mxu0 0.0
    %846 = vmatprep.subr.mxu0 0.0
    %847 = vmatpush2.msra.mxu0 0.0
    %848 = vmatprep.subr.mxu0 0.0
    %849 = vmatpush2.msra.mxu0 0.0
    %850 = vmatprep.subr.mxu0 0.0
    %851 = vmatpush2.msra.mxu0 0.0
    %852 = vmatprep.subr.mxu0 0.0
    %853 = vmatpush2.msra.mxu0 0.0
    %854 = vmatprep.subr.mxu0 0.0
    %855 = vmatpush2.msra.mxu0 0.0
    %856 = vmatprep.mubr.f32.mxu0 0.0
    %857 = vmatmul.mubr.f32.gmra.mxu0 %v790
    %v858 = vpop.f32.mrf.mxu0
    %v859 = vadd.f32 0.0, %v858
    %v860 = vpop.f32.mrf.mxu0
    %861 = vdwg.mxu0
    %v862 = vadd.f32 %v176, %v859
    %v863 = vxor.u32 %v862, 2147483648
    %v864 = vmul.f32 %v863, 1.442695
    %v865 = vpow.pop %v864
    %v866 = vadd.f32 %v865, 1.0
    %v867 = vrcp.pop %v866
    %v868 = vmul.f32 1.0, %v867
    %v869 = vtanh.pop %v862
    %v870 = vmul.f32 %v868, %v780
    %872 = vrot.lane.b32.xlu0 %v869, 32
    %v873 = vpop.permute.xlu0 %872
    %v875 = vmul.f32 %v868, %v873
    %877 = vrot.lane.b32.xlu0 %v875, 32
    %v878 = vpop.permute.xlu0 %877
    %v880 = vadd.f32 %v870, %v878
    %v881 = vtanh.pop %v880
    %883 = vrot.lane.b32.xlu0 %v881, 32
    %v884 = vpop.permute.xlu0 %883
    %v886 = vmul.f32 %v868, %v884
    %888 = vrot.lane.b32.xlu0 %v886, 64
    %v889 = vpop.permute.xlu0 %888
    %v890 = vsel %vm188, %v889, 0
    %892 = vmatprep.subr.mxu0 0.0
    %893 = vmatpush1.msra.mxu0 0.0
    %894 = vmatprep.subr.mxu0 0.0
    %895 = vmatpush1.msra.mxu0 0.0
    %896 = vmatprep.subr.mxu0 0.0
    %897 = vmatpush1.msra.mxu0 0.0
    %898 = vmatprep.subr.mxu0 0.0
    %899 = vmatpush1.msra.mxu0 0.0
    %900 = vmatprep.subr.mxu0 0.0
    %901 = vmatpush1.msra.mxu0 0.0
    %902 = vmatprep.subr.mxu0 0.0
    %903 = vmatpush1.msra.mxu0 0.0
    %904 = vmatprep.subr.mxu0 0.0
    %905 = vmatpush1.msra.mxu0 0.0
    %906 = vmatprep.subr.mxu0 0.0
    %907 = vmatpush1.msra.mxu0 0.0
    %908 = vmatprep.subr.mxu0 0.0
    %909 = vmatpush1.msra.mxu0 0.0
    %910 = vmatprep.subr.mxu0 0.0
    %911 = vmatpush1.msra.mxu0 0.0
    %912 = vmatprep.subr.mxu0 0.0
    %913 = vmatpush1.msra.mxu0 0.0
    %914 = vmatprep.subr.mxu0 0.0
    %915 = vmatpush1.msra.mxu0 0.0
    %916 = vmatprep.subr.mxu0 0.0
    %917 = vmatpush1.msra.mxu0 %v187
    %918 = vmatprep.subr.mxu0 0.0
    %919 = vmatpush1.msra.mxu0 %v186
    %920 = vmatprep.subr.mxu0 0.0
    %921 = vmatpush1.msra.mxu0 %v185
    %922 = vmatprep.subr.mxu0 0.0
    %923 = vmatpush1.msra.mxu0 %v184
    %924 = vmatprep.subr.mxu0 0.0
    %925 = vmatpush2.msra.mxu0 0.0
    %926 = vmatprep.subr.mxu0 0.0
    %927 = vmatpush2.msra.mxu0 0.0
    %928 = vmatprep.subr.mxu0 0.0
    %929 = vmatpush2.msra.mxu0 0.0
    %930 = vmatprep.subr.mxu0 0.0
    %931 = vmatpush2.msra.mxu0 0.0
    %932 = vmatprep.subr.mxu0 0.0
    %933 = vmatpush2.msra.mxu0 0.0
    %934 = vmatprep.subr.mxu0 0.0
    %935 = vmatpush2.msra.mxu0 0.0
    %936 = vmatprep.subr.mxu0 0.0
    %937 = vmatpush2.msra.mxu0 0.0
    %938 = vmatprep.subr.mxu0 0.0
    %939 = vmatpush2.msra.mxu0 0.0
    %940 = vmatprep.subr.mxu0 0.0
    %941 = vmatpush2.msra.mxu0 0.0
    %942 = vmatprep.subr.mxu0 0.0
    %943 = vmatpush2.msra.mxu0 0.0
    %944 = vmatprep.subr.mxu0 0.0
    %945 = vmatpush2.msra.mxu0 0.0
    %946 = vmatprep.subr.mxu0 0.0
    %947 = vmatpush2.msra.mxu0 0.0
    %948 = vmatprep.subr.mxu0 0.0
    %949 = vmatpush2.msra.mxu0 0.0
    %950 = vmatprep.subr.mxu0 0.0
    %951 = vmatpush2.msra.mxu0 0.0
    %952 = vmatprep.subr.mxu0 0.0
    %953 = vmatpush2.msra.mxu0 0.0
    %954 = vmatprep.subr.mxu0 0.0
    %955 = vmatpush2.msra.mxu0 0.0
    %956 = vmatprep.mubr.f32.mxu0 0.0
    %957 = vmatmul.mubr.f32.gmra.mxu0 %v890
    %v958 = vpop.f32.mrf.mxu0
    %v959 = vadd.f32 0.0, %v958
    %v960 = vpop.f32.mrf.mxu0
    %961 = vdwg.mxu0
    %v962 = vadd.f32 %v181, %v959
    %v963 = vxor.u32 %v962, 2147483648
    %v964 = vmul.f32 %v963, 1.442695
    %v965 = vpow.pop %v964
    %v966 = vadd.f32 %v965, 1.0
    %v967 = vrcp.pop %v966
    %v968 = vmul.f32 1.0, %v967
    %v969 = vtanh.pop %v962
    %v970 = vmul.f32 %v968, %v880
    %972 = vrot.lane.b32.xlu0 %v969, 32
    %v973 = vpop.permute.xlu0 %972
    %v975 = vmul.f32 %v968, %v973
    %977 = vrot.lane.b32.xlu0 %v975, 32
    %v978 = vpop.permute.xlu0 %977
    %v980 = vadd.f32 %v970, %v978
    %v981 = vtanh.pop %v980
    %983 = vrot.lane.b32.xlu0 %v981, 32
    %v984 = vpop.permute.xlu0 %983
    %v986 = vmul.f32 %v968, %v984
    %v987 = vld [vmem:[%s4] sm:$0xff]
    %v988 = vld [vmem:[%s4 + $0x8] sm:$0xff]
    %v989 = vld [vmem:[%s4 + $0x10] sm:$0xff]
    %v990 = vld [vmem:[%s4 + $0x18] sm:$0xff]
    %992 = vrot.lane.b32.xlu0 %v986, 64
    %v993 = vpop.permute.xlu0 %992
    %v994 = vsel %vm188, %v993, 0
    %996 = vmatprep.subr.mxu0 0.0
    %997 = vmatpush1.msra.mxu0 0.0
    %998 = vmatprep.subr.mxu0 0.0
    %999 = vmatpush1.msra.mxu0 0.0
    %1000 = vmatprep.subr.mxu0 0.0
    %1001 = vmatpush1.msra.mxu0 0.0
    %1002 = vmatprep.subr.mxu0 0.0
    %1003 = vmatpush1.msra.mxu0 0.0
    %1004 = vmatprep.subr.mxu0 0.0
    %1005 = vmatpush1.msra.mxu0 0.0
    %1006 = vmatprep.subr.mxu0 0.0
    %1007 = vmatpush1.msra.mxu0 0.0
    %1008 = vmatprep.subr.mxu0 0.0
    %1009 = vmatpush1.msra.mxu0 0.0
    %1010 = vmatprep.subr.mxu0 0.0
    %1011 = vmatpush1.msra.mxu0 0.0
    %1012 = vmatprep.subr.mxu0 0.0
    %1013 = vmatpush1.msra.mxu0 0.0
    %1014 = vmatprep.subr.mxu0 0.0
    %1015 = vmatpush1.msra.mxu0 0.0
    %1016 = vmatprep.subr.mxu0 0.0
    %1017 = vmatpush1.msra.mxu0 0.0
    %1018 = vmatprep.subr.mxu0 0.0
    %1019 = vmatpush1.msra.mxu0 0.0
    %1020 = vmatprep.subr.mxu0 0.0
    %1021 = vmatpush1.msra.mxu0 %v990
    %1022 = vmatprep.subr.mxu0 0.0
    %1023 = vmatpush1.msra.mxu0 %v989
    %1024 = vmatprep.subr.mxu0 0.0
    %1025 = vmatpush1.msra.mxu0 %v988
    %1026 = vmatprep.subr.mxu0 0.0
    %1027 = vmatpush1.msra.mxu0 %v987
    %1028 = vmatprep.subr.mxu0 0.0
    %1029 = vmatpush2.msra.mxu0 0.0
    %1030 = vmatprep.subr.mxu0 0.0
    %1031 = vmatpush2.msra.mxu0 0.0
    %1032 = vmatprep.subr.mxu0 0.0
    %1033 = vmatpush2.msra.mxu0 0.0
    %1034 = vmatprep.subr.mxu0 0.0
    %1035 = vmatpush2.msra.mxu0 0.0
    %1036 = vmatprep.subr.mxu0 0.0
    %1037 = vmatpush2.msra.mxu0 0.0
    %1038 = vmatprep.subr.mxu0 0.0
    %1039 = vmatpush2.msra.mxu0 0.0
    %1040 = vmatprep.subr.mxu0 0.0
    %1041 = vmatpush2.msra.mxu0 0.0
    %1042 = vmatprep.subr.mxu0 0.0
    %1043 = vmatpush2.msra.mxu0 0.0
    %1044 = vmatprep.subr.mxu0 0.0
    %1045 = vmatpush2.msra.mxu0 0.0
    %1046 = vmatprep.subr.mxu0 0.0
    %1047 = vmatpush2.msra.mxu0 0.0
    %1048 = vmatprep.subr.mxu0 0.0
    %1049 = vmatpush2.msra.mxu0 0.0
    %1050 = vmatprep.subr.mxu0 0.0
    %1051 = vmatpush2.msra.mxu0 0.0
    %1052 = vmatprep.subr.mxu0 0.0
    %1053 = vmatpush2.msra.mxu0 0.0
    %1054 = vmatprep.subr.mxu0 0.0
    %1055 = vmatpush2.msra.mxu0 0.0
    %1056 = vmatprep.subr.mxu0 0.0
    %1057 = vmatpush2.msra.mxu0 0.0
    %1058 = vmatprep.subr.mxu0 0.0
    %1059 = vmatpush2.msra.mxu0 0.0
    %1060 = vmatprep.mubr.f32.mxu0 0.0
    %1061 = vmatmul.mubr.f32.gmra.mxu0 %v290
    %v1062 = vpop.f32.mrf.mxu0
    %v1063 = vadd.f32 0.0, %v1062
    %v1064 = vpop.f32.mrf.mxu0
    %1065 = vmatprep.mubr.f32.mxu0 0.0
    %1066 = vmatmul.mubr.f32.gmra.mxu0 %v390
    %v1067 = vpop.f32.mrf.mxu0
    %v1068 = vadd.f32 0.0, %v1067
    %v1069 = vpop.f32.mrf.mxu0
    %1070 = vmatprep.mubr.f32.mxu0 0.0
    %1071 = vmatmul.mubr.f32.gmra.mxu0 %v490
    %v1072 = vpop.f32.mrf.mxu0
    %v1073 = vadd.f32 0.0, %v1072
    %v1074 = vpop.f32.mrf.mxu0
    %1075 = vmatprep.mubr.f32.mxu0 0.0
    %1076 = vmatmul.mubr.f32.gmra.mxu0 %v590
    %v1077 = vpop.f32.mrf.mxu0
    %v1078 = vadd.f32 0.0, %v1077
    %v1079 = vpop.f32.mrf.mxu0
    %1080 = vmatprep.mubr.f32.mxu0 0.0
    %1081 = vmatmul.mubr.f32.gmra.mxu0 %v690
    %v1082 = vpop.f32.mrf.mxu0
    %v1083 = vadd.f32 0.0, %v1082
    %v1084 = vpop.f32.mrf.mxu0
    %1085 = vmatprep.mubr.f32.mxu0 0.0
    %1086 = vmatmul.mubr.f32.gmra.mxu0 %v790
    %v1087 = vpop.f32.mrf.mxu0
    %v1088 = vadd.f32 0.0, %v1087
    %v1089 = vpop.f32.mrf.mxu0
    %1090 = vmatprep.mubr.f32.mxu0 0.0
    %1091 = vmatmul.mubr.f32.gmra.mxu0 %v890
    %v1092 = vpop.f32.mrf.mxu0
    %v1093 = vadd.f32 0.0, %v1092
    %v1094 = vpop.f32.mrf.mxu0
    %1095 = vmatprep.mubr.f32.mxu0 0.0
    %1096 = vmatmul.mubr.f32.gmra.mxu0 %v994
    %v1097 = vpop.f32.mrf.mxu0
    %v1098 = vadd.f32 0.0, %v1097
    %v1099 = vpop.f32.mrf.mxu0
    %1100 = vdwg.mxu0
    %vm1101 = vcmask 130048
    %v1102 = vsel %vm1101, %v1063, 0.0
    %v1103 = vsel %vm1101, %v1068, 0.0
    %v1104 = vadd.f32 %v1102, %v1103
    %v1105 = vsel %vm1101, %v1073, 0.0
    %v1106 = vadd.f32 %v1104, %v1105
    %v1107 = vsel %vm1101, %v1078, 0.0
    %v1108 = vadd.f32 %v1106, %v1107
    %v1109 = vsel %vm1101, %v1083, 0.0
    %v1110 = vadd.f32 %v1108, %v1109
    %v1111 = vsel %vm1101, %v1088, 0.0
    %v1112 = vadd.f32 %v1110, %v1111
    %v1113 = vsel %vm1101, %v1093, 0.0
    %v1114 = vadd.f32 %v1112, %v1113
    %v1115 = vsel %vm1101, %v1098, 0.0
    %v1116 = vadd.f32 %v1114, %v1115
    %v1117 = vrot.slane %v1116, 4
    %v1118 = vadd.f32 %v1116, %v1117
    %v1119 = vrot.slane %v1118, 2
    %v1120 = vadd.f32 %v1118, %v1119
    %v1121 = vrot.slane %v1120, 1
    %v1122 = vadd.f32 %v1120, %v1121
    %v1123 = vrcp.pop 64.0
    %v1124 = vmul.f32 %v1122, %v1123
    %v1125 = vsub.f32 %v1063, %v1124
    %v1126 = vsub.f32 %v1068, %v1124
    %v1127 = vsub.f32 %v1073, %v1124
    %v1128 = vsub.f32 %v1078, %v1124
    %v1129 = vsub.f32 %v1083, %v1124
    %v1130 = vsub.f32 %v1088, %v1124
    %v1131 = vsub.f32 %v1093, %v1124
    %v1132 = vsub.f32 %v1098, %v1124
    %v1133 = vmul.f32 %v1125, %v1125
    %v1134 = vmul.f32 %v1126, %v1126
    %v1135 = vmul.f32 %v1127, %v1127
    %v1136 = vmul.f32 %v1128, %v1128
    %v1137 = vmul.f32 %v1129, %v1129
    %v1138 = vmul.f32 %v1130, %v1130
    %v1139 = vmul.f32 %v1131, %v1131
    %v1140 = vmul.f32 %v1132, %v1132
    %v1141 = vsel %vm1101, %v1133, 0.0
    %v1142 = vsel %vm1101, %v1134, 0.0
    %v1143 = vadd.f32 %v1141, %v1142
    %v1144 = vsel %vm1101, %v1135, 0.0
    %v1145 = vadd.f32 %v1143, %v1144
    %v1146 = vsel %vm1101, %v1136, 0.0
    %v1147 = vadd.f32 %v1145, %v1146
    %v1148 = vsel %vm1101, %v1137, 0.0
    %v1149 = vadd.f32 %v1147, %v1148
    %v1150 = vsel %vm1101, %v1138, 0.0
    %v1151 = vadd.f32 %v1149, %v1150
    %v1152 = vsel %vm1101, %v1139, 0.0
    %v1153 = vadd.f32 %v1151, %v1152
    %v1154 = vsel %vm1101, %v1140, 0.0
    %v1155 = vadd.f32 %v1153, %v1154
    %v1156 = vrot.slane %v1155, 4
    %v1157 = vadd.f32 %v1155, %v1156
    %v1158 = vrot.slane %v1157, 2
    %v1159 = vadd.f32 %v1157, %v1158
    %v1160 = vrot.slane %v1159, 1
    %v1161 = vadd.f32 %v1159, %v1160
    %v1162 = vmul.f32 %v1161, %v1123
    %v1163 = vld [vmem:[%s5] sm:$0x1]
    %v1164 = vadd.f32 %v1162, 1e-05
    %v1165 = vrsqrt.pop %v1164
    %v1166 = vmul.f32 %v1163, %v1165
    %v1167 = vld [vmem:[%s6] sm:$0x1]
    %v1168 = vmul.f32 %v1124, %v1166
    %v1169 = vsub.f32 %v1167, %v1168
    %v1171 = vlaneseq
    %v1172 = vshrl.u32 %v1171, 7
    %v1173 = vsub.s32 0, %v1172
    %v1174 = vrot.slane %v1166, %v1173
    %v1176 = vmul.f32 %v1063, %v1174
    %v1177 = vmul.f32 %v1068, %v1174
    %v1178 = vmul.f32 %v1073, %v1174
    %v1179 = vmul.f32 %v1078, %v1174
    %v1180 = vmul.f32 %v1083, %v1174
    %v1181 = vmul.f32 %v1088, %v1174
    %v1182 = vmul.f32 %v1093, %v1174
    %v1183 = vmul.f32 %v1098, %v1174
    %v1185 = vlaneseq
    %v1186 = vshrl.u32 %v1185, 7
    %v1187 = vsub.s32 0, %v1186
    %v1188 = vrot.slane %v1169, %v1187
    %v1190 = vadd.f32 %v1176, %v1188
    %v1191 = vadd.f32 %v1177, %v1188
    %v1192 = vadd.f32 %v1178, %v1188
    %v1193 = vadd.f32 %v1179, %v1188
    %v1194 = vadd.f32 %v1180, %v1188
    %v1195 = vadd.f32 %v1181, %v1188
    %v1196 = vadd.f32 %v1182, %v1188
    %v1197 = vadd.f32 %v1183, %v1188
    %v1198 = vmax.f32 %v1190, 0.0
    %v1199 = vmax.f32 %v1191, 0.0
    %v1200 = vmax.f32 %v1192, 0.0
    %v1201 = vmax.f32 %v1193, 0.0
    %v1202 = vmax.f32 %v1194, 0.0
    %v1203 = vmax.f32 %v1195, 0.0
    %v1204 = vmax.f32 %v1196, 0.0
    %v1205 = vmax.f32 %v1197, 0.0
    %s1206 = sld [smem:[#allocation2]]
    %v1207 = vld [vmem:[%s7] sm:$0x1]
    %v1208 = vstv %s1206
    %v1210 = vsel %vm1101, %v1207, 0
    %v1213 = vsel %vm1101, %v1198, 0
    %v1216 = vsel %vm1101, %v1199, 0
    %v1219 = vsel %vm1101, %v1200, 0
    %v1222 = vsel %vm1101, %v1201, 0
    %v1225 = vsel %vm1101, %v1202, 0
    %v1228 = vsel %vm1101, %v1203, 0
    %v1231 = vsel %vm1101, %v1204, 0
    %v1234 = vsel %vm1101, %v1205, 0
    %1236 = vmatprep.subr.mxu0 0.0
    %1237 = vmatpush1.xpose.msra.mxu0 0.0
    %1238 = vmatprep.subr.mxu0 0.0
    %1239 = vmatpush1.xpose.msra.mxu0 0.0
    %1240 = vmatprep.subr.mxu0 0.0
    %1241 = vmatpush1.xpose.msra.mxu0 0.0
    %1242 = vmatprep.subr.mxu0 0.0
    %1243 = vmatpush1.xpose.msra.mxu0 0.0
    %1244 = vmatprep.subr.mxu0 0.0
    %1245 = vmatpush1.xpose.msra.mxu0 0.0
    %1246 = vmatprep.subr.mxu0 0.0
    %1247 = vmatpush1.xpose.msra.mxu0 0.0
    %1248 = vmatprep.subr.mxu0 0.0
    %1249 = vmatpush1.xpose.msra.mxu0 0.0
    %1250 = vmatprep.subr.mxu0 0.0
    %1251 = vmatpush1.xpose.msra.mxu0 0.0
    %1252 = vmatprep.subr.mxu0 0.0
    %1253 = vmatpush1.xpose.msra.mxu0 %v1234
    %1254 = vmatprep.subr.mxu0 0.0
    %1255 = vmatpush1.xpose.msra.mxu0 %v1231
    %1256 = vmatprep.subr.mxu0 0.0
    %1257 = vmatpush1.xpose.msra.mxu0 %v1228
    %1258 = vmatprep.subr.mxu0 0.0
    %1259 = vmatpush1.xpose.msra.mxu0 %v1225
    %1260 = vmatprep.subr.mxu0 0.0
    %1261 = vmatpush1.xpose.msra.mxu0 %v1222
    %1262 = vmatprep.subr.mxu0 0.0
    %1263 = vmatpush1.xpose.msra.mxu0 %v1219
    %1264 = vmatprep.subr.mxu0 0.0
    %1265 = vmatpush1.xpose.msra.mxu0 %v1216
    %1266 = vmatprep.subr.mxu0 0.0
    %1267 = vmatpush1.xpose.msra.mxu0 %v1213
    %1268 = vmatprep.subr.mxu0 0.0
    %1269 = vmatpush2.xpose.msra.mxu0 0.0
    %1270 = vmatprep.subr.mxu0 0.0
    %1271 = vmatpush2.xpose.msra.mxu0 0.0
    %1272 = vmatprep.subr.mxu0 0.0
    %1273 = vmatpush2.xpose.msra.mxu0 0.0
    %1274 = vmatprep.subr.mxu0 0.0
    %1275 = vmatpush2.xpose.msra.mxu0 0.0
    %1276 = vmatprep.subr.mxu0 0.0
    %1277 = vmatpush2.xpose.msra.mxu0 0.0
    %1278 = vmatprep.subr.mxu0 0.0
    %1279 = vmatpush2.xpose.msra.mxu0 0.0
    %1280 = vmatprep.subr.mxu0 0.0
    %1281 = vmatpush2.xpose.msra.mxu0 0.0
    %1282 = vmatprep.subr.mxu0 0.0
    %1283 = vmatpush2.xpose.msra.mxu0 0.0
    %1284 = vmatprep.subr.mxu0 0.0
    %1285 = vmatpush2.xpose.msra.mxu0 0.0
    %1286 = vmatprep.subr.mxu0 0.0
    %1287 = vmatpush2.xpose.msra.mxu0 0.0
    %1288 = vmatprep.subr.mxu0 0.0
    %1289 = vmatpush2.xpose.msra.mxu0 0.0
    %1290 = vmatprep.subr.mxu0 0.0
    %1291 = vmatpush2.xpose.msra.mxu0 0.0
    %1292 = vmatprep.subr.mxu0 0.0
    %1293 = vmatpush2.xpose.msra.mxu0 0.0
    %1294 = vmatprep.subr.mxu0 0.0
    %1295 = vmatpush2.xpose.msra.mxu0 0.0
    %1296 = vmatprep.subr.mxu0 0.0
    %1297 = vmatpush2.xpose.msra.mxu0 0.0
    %1298 = vmatprep.subr.mxu0 0.0
    %1299 = vmatpush2.xpose.msra.mxu0 0.0
    %1300 = vmatprep.mubr.f32.mxu0 0.0
    %1301 = vmatmul.mubr.f32.gmra.mxu0 %v1210
    %v1302 = vpop.f32.mrf.mxu0
    %v1303 = vadd.f32 %v1208, %v1302
    %v1304 = vpop.f32.mrf.mxu0
    %1305 = vdwg.mxu0
    %vm1306 = vcmask 516096
    %1307 = vst.msk [vmem:[#allocation3] sm:$0x1] %vm1306, %v1303
    // Predicated region
    $region38: #{tpu_custom_call.1} parent=1 // pred_check
      _
    $region39: #{tpu_custom_call.1} parent=1 // pred_check_branch
      %1309 = sbr.rel (0) target = $region41
    $region40: #{tpu_custom_call.1} parent=1 // pred_region
      %s1311 = ssub.s32 16, 16
      %1312 = vsyncadd [#allocation4], %s1311
      %s1314 = sshll.u32 [#allocation3], 4
      %s1315 = int_to_ptr.vmem [resolvable:$true] %s1314
      %1317 = dma.vmem_to_hbm [thread:$0]  %s1315, 16, %s9, [#allocation4]
    $region41: #{tpu_custom_call.1} parent=1 // pred_fallthru
      _
    // Predicated region
    $region42: #{tpu_custom_call.1} parent=1 // pred_check
      _
    $region43: #{tpu_custom_call.1} parent=1 // pred_check_branch
      %1319 = sbr.rel (0) target = $region45
    $region44: #{tpu_custom_call.1} parent=1 // pred_region
      %1320 = dma.done [#allocation4], 16
    $region45: #{tpu_custom_call.1} parent=1 // pred_fallthru
      _
    %1321 = vsyncpa [#allocation4], 1

</llo_original>
